<compile_context>
chip_gen: v5e
topology: v5e:2x2
jax: 0.10.0
libtpu: 0.0.40
codegen_flags: <defaults>
</compile_context>

<pallas_src>
import math
import jax
import jax.numpy as jnp
from jax.experimental import pallas as pl
from jax.experimental.pallas import tpu as pltpu

# ---- problem sizes (small, deterministic demo) ------------------------------
N = 16        # number of nodes
F = 32        # in_channel == out_channel (required by the gating element-wise mul)
H = 4         # trans_heads
T = 3         # num_edge_type
SH = 2        # semantic_head
HID = 128     # SemanticAttention hidden size
HF = H * F    # head-stacked q/k/v contraction width (128)
HN = H * N    # head-stacked row count (64)
E = 40        # number of edges


# ---- fused kernel ------------------------------------------------------------
def _rgt_kernel(x_ref, xbd_ref, mask_ref, wqkv_ref, bqkv_ref, wsg_ref, bsg_ref,
                wgu_ref, w1_ref, b1_ref, w2bd_ref, out_ref):
    x = x_ref[...]                                             # [N, F]

    # ONE projection for q/k/v of ALL relations, head-stacked along rows.
    proj = jnp.dot(xbd_ref[...], wqkv_ref[...],
                   preferred_element_type=jnp.float32) + bqkv_ref[...]   # [HN, T*3*F]

    # ONE per-node projection: [skip_0 | skip_1 | skip_2 | gate_x] (128 lanes).
    sg = jnp.dot(x, wsg_ref[...], preferred_element_type=jnp.float32) + bsg_ref[...]
    gate_x = sg[:, T * F:(T + 1) * F]                          # [N, F]

    u_list = []
    for t in range(T):                       # static unroll; chains are independent
        base = t * 3 * F
        q = proj[:, base:base + F]           # [HN, F]  (1/sqrt(F) folded in wrapper)
        k = proj[:, base + F:base + 2 * F]   # [HN, F]
        v = proj[:, base + 2 * F:base + 3 * F]   # [HN, F]  (1/H folded in wrapper)
        msk = mask_ref[t]                    # [HN, HN] = kron(eye(H), adj_t)

        s = jnp.dot(q, k.T, preferred_element_type=jnp.float32)          # [HN, HN]
        s = jnp.where(msk > 0, s, jnp.float32(-1e30))
        smax = jnp.max(s, axis=1, keepdims=True)
        e = jnp.where(msk > 0, jnp.exp(s - smax), 0.0)    # explicit zeroing: empty rows -> 0
        den = jnp.sum(e, axis=1, keepdims=True)
        p = e / jnp.maximum(den, jnp.float32(1e-30))
        pv = jnp.dot(p, v, preferred_element_type=jnp.float32)           # [HN, F]

        # mean over heads (1/H already in v) + root skip
        hsum = pv[0:N] + pv[N:2 * N] + pv[2 * N:3 * N] + pv[3 * N:4 * N]  # [N, F]
        u_list.append(hsum + sg[:, t * F:(t + 1) * F])

    # ---- gate + combine, batched over all T relations ------------------------
    u_all = jnp.concatenate(u_list, axis=0)                    # [T*N, F]
    x3 = jnp.concatenate([x] * T, axis=0)                      # [T*N, F]
    gx3 = jnp.concatenate([gate_x] * T, axis=0)                # [T*N, F]
    a = jax.nn.sigmoid(jnp.dot(u_all, wgu_ref[...],
                               preferred_element_type=jnp.float32) + gx3)
    z_all = jnp.tanh(u_all) * a + x3 * (1.0 - a)               # [T*N, F]

    # ---- semantic attention: scores on the MXU, tiny 3-wide softmax ----------
    hdn = jnp.tanh(jnp.dot(z_all, w1_ref[...],
                           preferred_element_type=jnp.float32) + b1_ref[...])   # [T*N, SH*HID]
    sc = jnp.dot(hdn, w2bd_ref[...],
                 preferred_element_type=jnp.float32)[:, 0:SH]                   # [T*N, SH]
    wts = [jnp.sum(sc[t * N:(t + 1) * N], axis=0, keepdims=True) * (1.0 / N)
           for t in range(T)]                                  # T x [1, SH]
    m = wts[0]
    for t in range(1, T):
        m = jnp.maximum(m, wts[t])
    es = [jnp.exp(w - m) for w in wts]
    den = es[0]
    for t in range(1, T):
        den = den + es[t]
    out = jnp.zeros((N, F), jnp.float32)
    for t in range(T):
        coef = jnp.sum(es[t] / den, axis=1, keepdims=True) * (1.0 / SH)   # [1, 1]
        out = out + coef * z_all[t * N:(t + 1) * N]
    out_ref[...] = out


# ---- wrapper: plain-JAX weight repacking + pallas_call -----------------------
def rgt_layer_forward(x, adj, params):
    scale = 1.0 / math.sqrt(F)

    # head-stacked q/k/v weights: rows (head, in_feature), cols (t, role, f)
    def stack_w(w):                                  # [T, F, H*F] -> [H, F, T, F]
        return jnp.transpose(w.reshape(T, F, H, F), (2, 1, 0, 3))

    def stack_b(b):                                  # [T, 1, H*F] -> [H, T, F]
        return jnp.transpose(b.reshape(T, H, F), (1, 0, 2))

    wq = stack_w(params["wq"]) * scale
    wk = stack_w(params["wk"])
    wv = stack_w(params["wv"]) * (1.0 / H)
    bq = stack_b(params["bq"]) * scale
    bk = stack_b(params["bk"])
    bv = stack_b(params["bv"]) * (1.0 / H)
    w_qkv = jnp.stack([wq, wk, wv], axis=3).reshape(H * F, T * 3 * F)       # [128, 288]
    b_qkv = jnp.repeat(jnp.stack([bq, bk, bv], axis=2).reshape(H, T * 3 * F),
                       N, axis=0)                                           # [64, 288]

    # block-diagonal node features and per-relation head-blocked masks
    x_bd = jnp.kron(jnp.eye(H, dtype=jnp.float32), x)                       # [64, 128]
    eyeH = jnp.eye(H, dtype=jnp.float32)
    mask = (eyeH[None, :, None, :, None] *
            adj[:, None, :, None, :]).reshape(T, HN, HN)                    # [T, 64, 64]

    # skip / gate_x projection packed into one 128-lane matmul
    wg_u, wg_x = params["wg"][:F], params["wg"][F:]
    w_sg = jnp.concatenate([params["wskip"][t] for t in range(T)] + [wg_x], axis=1)         # [32, 128]
    b_sg = jnp.concatenate([params["bskip"][t] for t in range(T)] + [params["bg"]], axis=1)  # [1, 128]

    # semantic attention weights
    w1cat = jnp.transpose(params["sem_w1"], (1, 0, 2)).reshape(F, SH * HID)  # [32, 256]
    b1cat = jnp.transpose(params["sem_b1"], (1, 0, 2)).reshape(1, SH * HID)  # [1, 256]
    w2_cols = [jnp.zeros((SH, HID), jnp.float32).at[s].set(params["sem_w2"][s, :, 0])
               .reshape(SH * HID, 1) for s in range(SH)]
    w2bd = jnp.concatenate(w2_cols + [jnp.zeros((SH * HID, 128 - SH), jnp.float32)],
                           axis=1)                                           # [256, 128]

    vspec = lambda: pl.BlockSpec(memory_space=pltpu.MemorySpace.VMEM)
    out = pl.pallas_call(
        _rgt_kernel,
        out_shape=jax.ShapeDtypeStruct((N, F), jnp.float32),
        in_specs=[vspec() for _ in range(11)],
        out_specs=vspec(),
        cost_estimate=pl.CostEstimate(flops=7_500_000, transcendentals=28_000,
                                      bytes_accessed=470_000),
    )(x, x_bd, mask, w_qkv, b_qkv, w_sg, b_sg, wg_u, w1cat, b1cat, w2bd)
    return out


# ---- pure-JAX reference (same math) for a correctness check ------------------
def reference(x, adj, p):
    embs = []
    for t in range(T):
        q = x @ p["wq"][t] + p["bq"][t, 0]
        k = x @ p["wk"][t] + p["bk"][t, 0]
        v = x @ p["wv"][t] + p["bv"][t, 0]
        acc = jnp.zeros((N, F), jnp.float32)
        for h in range(H):
            qh, kh, vh = (a[:, h * F:(h + 1) * F] for a in (q, k, v))
            s = (qh @ kh.T) / math.sqrt(F)
            s = jnp.where(adj[t] > 0, s, -1e30)
            m = jnp.max(s, axis=1, keepdims=True)
            e = jnp.where(adj[t] > 0, jnp.exp(s - m), 0.0)
            den = jnp.sum(e, axis=1, keepdims=True)
            acc = acc + (e / jnp.maximum(den, 1e-30)) @ vh
        u = acc / H + x @ p["wskip"][t] + p["bskip"][t, 0]
        a = jax.nn.sigmoid(jnp.concatenate([u, x], axis=1) @ p["wg"] + p["bg"][0])
        embs.append(jnp.tanh(u) * a + x * (1.0 - a))
    z = jnp.stack(embs, axis=0)                      # [T, N, F]
    out = jnp.zeros((N, F), jnp.float32)
    for sh in range(SH):
        s = jnp.tanh(z @ p["sem_w1"][sh] + p["sem_b1"][sh]) @ p["sem_w2"][sh]  # [T, N, 1]
        w = jnp.mean(s, axis=1)                      # [T, 1]
        beta = jax.nn.softmax(w, axis=0)             # over T
        out = out + jnp.sum(beta[:, None, :] * z, axis=0)
    return out / SH


def make_params(key):
    ks = jax.random.split(key, 16)
    n = lambda k, shape, s=0.1: (s * jax.random.normal(k, shape)).astype(jnp.float32)
    return {
        "wq": n(ks[0], (T, F, HF)), "bq": n(ks[1], (T, 1, HF)),
        "wk": n(ks[2], (T, F, HF)), "bk": n(ks[3], (T, 1, HF)),
        "wv": n(ks[4], (T, F, HF)), "bv": n(ks[5], (T, 1, HF)),
        "wskip": n(ks[6], (T, F, F)), "bskip": n(ks[7], (T, 1, F)),
        "wg": n(ks[8], (2 * F, F)), "bg": n(ks[9], (1, F)),
        "sem_w1": n(ks[10], (SH, F, HID)), "sem_b1": n(ks[11], (SH, 1, HID)),
        "sem_w2": n(ks[12], (SH, HID, 1)),
    }


if __name__ == "__main__":
    key = jax.random.PRNGKey(0)
    kx, ke, kt, kp = jax.random.split(key, 4)

    # node features
    x = jax.random.normal(kx, (N, F), dtype=jnp.float32)

    # unique (src, dst) edge list + edge types (glue: converted to dense masks)
    perm = jax.random.permutation(ke, N * N)[:E]
    src = perm // N
    dst = perm % N
    edge_index = jnp.stack([src, dst]).astype(jnp.int32)        # (2, E)
    edge_type = jax.random.randint(kt, (E,), 0, T, dtype=jnp.int32)
    adj = jnp.zeros((T, N, N), jnp.float32).at[edge_type, dst, src].set(1.0)

    params = make_params(kp)

    out = rgt_layer_forward(x, adj, params)
    out = jax.block_until_ready(out)

    ref = reference(x, adj, params)
    assert out.shape == (N, F)
    assert jnp.allclose(out, ref, atol=1e-4, rtol=1e-4), \
        f"max abs err {jnp.max(jnp.abs(out - ref))}"

    print("KERNEL_OK")
</pallas_src>

<mosaic_0001>
module attributes {stable_mosaic.version = 11 : i64} {
  func.func @_rgt_kernel(%arg0: memref<16x32xf32, #tpu.memory_space<vmem>>, %arg1: memref<64x128xf32, #tpu.memory_space<vmem>>, %arg2: memref<3x64x64xf32, #tpu.memory_space<vmem>>, %arg3: memref<128x288xf32, #tpu.memory_space<vmem>>, %arg4: memref<64x288xf32, #tpu.memory_space<vmem>>, %arg5: memref<32x128xf32, #tpu.memory_space<vmem>>, %arg6: memref<1x128xf32, #tpu.memory_space<vmem>>, %arg7: memref<32x32xf32, #tpu.memory_space<vmem>>, %arg8: memref<32x256xf32, #tpu.memory_space<vmem>>, %arg9: memref<1x256xf32, #tpu.memory_space<vmem>>, %arg10: memref<256x128xf32, #tpu.memory_space<vmem>>, %arg11: memref<16x32xf32, #tpu.memory_space<vmem>>) attributes {dimension_semantics = [], scalar_prefetch = 0 : i64, scratch_operands = 0 : i64, tpu.core_type = #tpu.core_type<tc>} {
    %c0 = arith.constant 0 : index
    %c0_0 = arith.constant 0 : index
    %0 = vector.load %arg0[%c0, %c0_0] : memref<16x32xf32, #tpu.memory_space<vmem>>, vector<16x32xf32>
    %c0_1 = arith.constant 0 : index
    %c0_2 = arith.constant 0 : index
    %1 = vector.load %arg1[%c0_1, %c0_2] : memref<64x128xf32, #tpu.memory_space<vmem>>, vector<64x128xf32>
    %c0_3 = arith.constant 0 : index
    %c0_4 = arith.constant 0 : index
    %2 = vector.load %arg3[%c0_3, %c0_4] : memref<128x288xf32, #tpu.memory_space<vmem>>, vector<128x288xf32>
    %cst = arith.constant dense<0.000000e+00> : vector<64x288xf32>
    %3 = tpu.matmul %1, %2, %cst {dimension_numbers = #tpu.dot_dimension_numbers<[1], [0], [0], [1], [0, 0, 1, 1], [], []>} : vector<64x128xf32>, vector<128x288xf32>, vector<64x288xf32> -> vector<64x288xf32>
    %c0_5 = arith.constant 0 : index
    %c0_6 = arith.constant 0 : index
    %4 = vector.load %arg4[%c0_5, %c0_6] : memref<64x288xf32, #tpu.memory_space<vmem>>, vector<64x288xf32>
    %5 = arith.addf %3, %4 : vector<64x288xf32>
    %c0_7 = arith.constant 0 : index
    %c0_8 = arith.constant 0 : index
    %6 = vector.load %arg5[%c0_7, %c0_8] : memref<32x128xf32, #tpu.memory_space<vmem>>, vector<32x128xf32>
    %cst_9 = arith.constant dense<0.000000e+00> : vector<16x128xf32>
    %7 = tpu.matmul %0, %6, %cst_9 {dimension_numbers = #tpu.dot_dimension_numbers<[1], [0], [0], [1], [0, 0, 1, 1], [], []>} : vector<16x32xf32>, vector<32x128xf32>, vector<16x128xf32> -> vector<16x128xf32>
    %c0_10 = arith.constant 0 : index
    %c0_11 = arith.constant 0 : index
    %8 = vector.load %arg6[%c0_10, %c0_11] : memref<1x128xf32, #tpu.memory_space<vmem>>, vector<1x128xf32>
    %9 = vector.broadcast %8 : vector<1x128xf32> to vector<16x128xf32>
    %10 = arith.addf %7, %9 : vector<16x128xf32>
    %11 = vector.extract_strided_slice %10 {offsets = [0, 96], sizes = [16, 32], strides = [1, 1]} : vector<16x128xf32> to vector<16x32xf32>
    %12 = vector.extract_strided_slice %5 {offsets = [0, 0], sizes = [64, 32], strides = [1, 1]} : vector<64x288xf32> to vector<64x32xf32>
    %13 = vector.extract_strided_slice %5 {offsets = [0, 32], sizes = [64, 32], strides = [1, 1]} : vector<64x288xf32> to vector<64x32xf32>
    %14 = vector.extract_strided_slice %5 {offsets = [0, 64], sizes = [64, 32], strides = [1, 1]} : vector<64x288xf32> to vector<64x32xf32>
    %c0_12 = arith.constant 0 : index
    %c0_13 = arith.constant 0 : index
    %c0_14 = arith.constant 0 : index
    %15 = vector.load %arg2[%c0_12, %c0_13, %c0_14] : memref<3x64x64xf32, #tpu.memory_space<vmem>>, vector<1x64x64xf32>
    %16 = vector.shape_cast %15 : vector<1x64x64xf32> to vector<64x64xf32>
    %17 = tpu.transpose %13, [1, 0] : vector<64x32xf32> -> vector<32x64xf32>
    %cst_15 = arith.constant dense<0.000000e+00> : vector<64x64xf32>
    %18 = tpu.matmul %12, %17, %cst_15 {dimension_numbers = #tpu.dot_dimension_numbers<[1], [0], [0], [1], [0, 0, 1, 1], [], []>} : vector<64x32xf32>, vector<32x64xf32>, vector<64x64xf32> -> vector<64x64xf32>
    %cst_16 = arith.constant 0.000000e+00 : f32
    %19 = vector.broadcast %cst_16 : f32 to vector<64x64xf32>
    %20 = arith.cmpf ogt, %16, %19 : vector<64x64xf32>
    %cst_17 = arith.constant -1.000000e+30 : f32
    %21 = vector.broadcast %cst_17 : f32 to vector<64x64xf32>
    %22 = arith.select %20, %18, %21 : vector<64x64xi1>, vector<64x64xf32>
    %cst_18 = arith.constant dense<0xFF800000> : vector<64xf32>
    %23 = vector.multi_reduction <maximumf>, %22, %cst_18 [1] : vector<64x64xf32> to vector<64xf32>
    %24 = vector.shape_cast %23 : vector<64xf32> to vector<64x1xf32>
    %cst_19 = arith.constant 0.000000e+00 : f32
    %25 = vector.broadcast %cst_19 : f32 to vector<64x64xf32>
    %26 = arith.cmpf ogt, %16, %25 : vector<64x64xf32>
    %27 = vector.broadcast %24 : vector<64x1xf32> to vector<64x64xf32>
    %28 = arith.subf %22, %27 : vector<64x64xf32>
    %29 = math.exp %28 : vector<64x64xf32>
    %cst_20 = arith.constant 0.000000e+00 : f32
    %30 = vector.broadcast %cst_20 : f32 to vector<64x64xf32>
    %31 = arith.select %26, %29, %30 : vector<64x64xi1>, vector<64x64xf32>
    %cst_21 = arith.constant dense<0.000000e+00> : vector<64xf32>
    %32 = vector.multi_reduction <add>, %31, %cst_21 [1] : vector<64x64xf32> to vector<64xf32>
    %33 = vector.shape_cast %32 : vector<64xf32> to vector<64x1xf32>
    %cst_22 = arith.constant 1.000000e-30 : f32
    %34 = vector.broadcast %cst_22 : f32 to vector<64x1xf32>
    %35 = arith.maximumf %33, %34 : vector<64x1xf32>
    %36 = vector.broadcast %35 : vector<64x1xf32> to vector<64x64xf32>
    %37 = arith.divf %31, %36 : vector<64x64xf32>
    %cst_23 = arith.constant dense<0.000000e+00> : vector<64x32xf32>
    %38 = tpu.matmul %37, %14, %cst_23 {dimension_numbers = #tpu.dot_dimension_numbers<[1], [0], [0], [1], [0, 0, 1, 1], [], []>} : vector<64x64xf32>, vector<64x32xf32>, vector<64x32xf32> -> vector<64x32xf32>
    %39 = vector.extract_strided_slice %38 {offsets = [0, 0], sizes = [16, 32], strides = [1, 1]} : vector<64x32xf32> to vector<16x32xf32>
    %40 = vector.extract_strided_slice %38 {offsets = [16, 0], sizes = [16, 32], strides = [1, 1]} : vector<64x32xf32> to vector<16x32xf32>
    %41 = arith.addf %39, %40 : vector<16x32xf32>
    %42 = vector.extract_strided_slice %38 {offsets = [32, 0], sizes = [16, 32], strides = [1, 1]} : vector<64x32xf32> to vector<16x32xf32>
    %43 = arith.addf %41, %42 : vector<16x32xf32>
    %44 = vector.extract_strided_slice %38 {offsets = [48, 0], sizes = [16, 32], strides = [1, 1]} : vector<64x32xf32> to vector<16x32xf32>
    %45 = arith.addf %43, %44 : vector<16x32xf32>
    %46 = vector.extract_strided_slice %10 {offsets = [0, 0], sizes = [16, 32], strides = [1, 1]} : vector<16x128xf32> to vector<16x32xf32>
    %47 = arith.addf %45, %46 : vector<16x32xf32>
    %48 = vector.extract_strided_slice %5 {offsets = [0, 96], sizes = [64, 32], strides = [1, 1]} : vector<64x288xf32> to vector<64x32xf32>
    %49 = vector.extract_strided_slice %5 {offsets = [0, 128], sizes = [64, 32], strides = [1, 1]} : vector<64x288xf32> to vector<64x32xf32>
    %50 = vector.extract_strided_slice %5 {offsets = [0, 160], sizes = [64, 32], strides = [1, 1]} : vector<64x288xf32> to vector<64x32xf32>
    %c1 = arith.constant 1 : index
    %c0_24 = arith.constant 0 : index
    %c0_25 = arith.constant 0 : index
    %51 = vector.load %arg2[%c1, %c0_24, %c0_25] : memref<3x64x64xf32, #tpu.memory_space<vmem>>, vector<1x64x64xf32>
    %52 = vector.shape_cast %51 : vector<1x64x64xf32> to vector<64x64xf32>
    %53 = tpu.transpose %49, [1, 0] : vector<64x32xf32> -> vector<32x64xf32>
    %cst_26 = arith.constant dense<0.000000e+00> : vector<64x64xf32>
    %54 = tpu.matmul %48, %53, %cst_26 {dimension_numbers = #tpu.dot_dimension_numbers<[1], [0], [0], [1], [0, 0, 1, 1], [], []>} : vector<64x32xf32>, vector<32x64xf32>, vector<64x64xf32> -> vector<64x64xf32>
    %cst_27 = arith.constant 0.000000e+00 : f32
    %55 = vector.broadcast %cst_27 : f32 to vector<64x64xf32>
    %56 = arith.cmpf ogt, %52, %55 : vector<64x64xf32>
    %cst_28 = arith.constant -1.000000e+30 : f32
    %57 = vector.broadcast %cst_28 : f32 to vector<64x64xf32>
    %58 = arith.select %56, %54, %57 : vector<64x64xi1>, vector<64x64xf32>
    %cst_29 = arith.constant dense<0xFF800000> : vector<64xf32>
    %59 = vector.multi_reduction <maximumf>, %58, %cst_29 [1] : vector<64x64xf32> to vector<64xf32>
    %60 = vector.shape_cast %59 : vector<64xf32> to vector<64x1xf32>
    %cst_30 = arith.constant 0.000000e+00 : f32
    %61 = vector.broadcast %cst_30 : f32 to vector<64x64xf32>
    %62 = arith.cmpf ogt, %52, %61 : vector<64x64xf32>
    %63 = vector.broadcast %60 : vector<64x1xf32> to vector<64x64xf32>
    %64 = arith.subf %58, %63 : vector<64x64xf32>
    %65 = math.exp %64 : vector<64x64xf32>
    %cst_31 = arith.constant 0.000000e+00 : f32
    %66 = vector.broadcast %cst_31 : f32 to vector<64x64xf32>
    %67 = arith.select %62, %65, %66 : vector<64x64xi1>, vector<64x64xf32>
    %cst_32 = arith.constant dense<0.000000e+00> : vector<64xf32>
    %68 = vector.multi_reduction <add>, %67, %cst_32 [1] : vector<64x64xf32> to vector<64xf32>
    %69 = vector.shape_cast %68 : vector<64xf32> to vector<64x1xf32>
    %cst_33 = arith.constant 1.000000e-30 : f32
    %70 = vector.broadcast %cst_33 : f32 to vector<64x1xf32>
    %71 = arith.maximumf %69, %70 : vector<64x1xf32>
    %72 = vector.broadcast %71 : vector<64x1xf32> to vector<64x64xf32>
    %73 = arith.divf %67, %72 : vector<64x64xf32>
    %cst_34 = arith.constant dense<0.000000e+00> : vector<64x32xf32>
    %74 = tpu.matmul %73, %50, %cst_34 {dimension_numbers = #tpu.dot_dimension_numbers<[1], [0], [0], [1], [0, 0, 1, 1], [], []>} : vector<64x64xf32>, vector<64x32xf32>, vector<64x32xf32> -> vector<64x32xf32>
    %75 = vector.extract_strided_slice %74 {offsets = [0, 0], sizes = [16, 32], strides = [1, 1]} : vector<64x32xf32> to vector<16x32xf32>
    %76 = vector.extract_strided_slice %74 {offsets = [16, 0], sizes = [16, 32], strides = [1, 1]} : vector<64x32xf32> to vector<16x32xf32>
    %77 = arith.addf %75, %76 : vector<16x32xf32>
    %78 = vector.extract_strided_slice %74 {offsets = [32, 0], sizes = [16, 32], strides = [1, 1]} : vector<64x32xf32> to vector<16x32xf32>
    %79 = arith.addf %77, %78 : vector<16x32xf32>
    %80 = vector.extract_strided_slice %74 {offsets = [48, 0], sizes = [16, 32], strides = [1, 1]} : vector<64x32xf32> to vector<16x32xf32>
    %81 = arith.addf %79, %80 : vector<16x32xf32>
    %82 = vector.extract_strided_slice %10 {offsets = [0, 32], sizes = [16, 32], strides = [1, 1]} : vector<16x128xf32> to vector<16x32xf32>
    %83 = arith.addf %81, %82 : vector<16x32xf32>
    %84 = vector.extract_strided_slice %5 {offsets = [0, 192], sizes = [64, 32], strides = [1, 1]} : vector<64x288xf32> to vector<64x32xf32>
    %85 = vector.extract_strided_slice %5 {offsets = [0, 224], sizes = [64, 32], strides = [1, 1]} : vector<64x288xf32> to vector<64x32xf32>
    %86 = vector.extract_strided_slice %5 {offsets = [0, 256], sizes = [64, 32], strides = [1, 1]} : vector<64x288xf32> to vector<64x32xf32>
    %c2 = arith.constant 2 : index
    %c0_35 = arith.constant 0 : index
    %c0_36 = arith.constant 0 : index
    %87 = vector.load %arg2[%c2, %c0_35, %c0_36] : memref<3x64x64xf32, #tpu.memory_space<vmem>>, vector<1x64x64xf32>
    %88 = vector.shape_cast %87 : vector<1x64x64xf32> to vector<64x64xf32>
    %89 = tpu.transpose %85, [1, 0] : vector<64x32xf32> -> vector<32x64xf32>
    %cst_37 = arith.constant dense<0.000000e+00> : vector<64x64xf32>
    %90 = tpu.matmul %84, %89, %cst_37 {dimension_numbers = #tpu.dot_dimension_numbers<[1], [0], [0], [1], [0, 0, 1, 1], [], []>} : vector<64x32xf32>, vector<32x64xf32>, vector<64x64xf32> -> vector<64x64xf32>
    %cst_38 = arith.constant 0.000000e+00 : f32
    %91 = vector.broadcast %cst_38 : f32 to vector<64x64xf32>
    %92 = arith.cmpf ogt, %88, %91 : vector<64x64xf32>
    %cst_39 = arith.constant -1.000000e+30 : f32
    %93 = vector.broadcast %cst_39 : f32 to vector<64x64xf32>
    %94 = arith.select %92, %90, %93 : vector<64x64xi1>, vector<64x64xf32>
    %cst_40 = arith.constant dense<0xFF800000> : vector<64xf32>
    %95 = vector.multi_reduction <maximumf>, %94, %cst_40 [1] : vector<64x64xf32> to vector<64xf32>
    %96 = vector.shape_cast %95 : vector<64xf32> to vector<64x1xf32>
    %cst_41 = arith.constant 0.000000e+00 : f32
    %97 = vector.broadcast %cst_41 : f32 to vector<64x64xf32>
    %98 = arith.cmpf ogt, %88, %97 : vector<64x64xf32>
    %99 = vector.broadcast %96 : vector<64x1xf32> to vector<64x64xf32>
    %100 = arith.subf %94, %99 : vector<64x64xf32>
    %101 = math.exp %100 : vector<64x64xf32>
    %cst_42 = arith.constant 0.000000e+00 : f32
    %102 = vector.broadcast %cst_42 : f32 to vector<64x64xf32>
    %103 = arith.select %98, %101, %102 : vector<64x64xi1>, vector<64x64xf32>
    %cst_43 = arith.constant dense<0.000000e+00> : vector<64xf32>
    %104 = vector.multi_reduction <add>, %103, %cst_43 [1] : vector<64x64xf32> to vector<64xf32>
    %105 = vector.shape_cast %104 : vector<64xf32> to vector<64x1xf32>
    %cst_44 = arith.constant 1.000000e-30 : f32
    %106 = vector.broadcast %cst_44 : f32 to vector<64x1xf32>
    %107 = arith.maximumf %105, %106 : vector<64x1xf32>
    %108 = vector.broadcast %107 : vector<64x1xf32> to vector<64x64xf32>
    %109 = arith.divf %103, %108 : vector<64x64xf32>
    %cst_45 = arith.constant dense<0.000000e+00> : vector<64x32xf32>
    %110 = tpu.matmul %109, %86, %cst_45 {dimension_numbers = #tpu.dot_dimension_numbers<[1], [0], [0], [1], [0, 0, 1, 1], [], []>} : vector<64x64xf32>, vector<64x32xf32>, vector<64x32xf32> -> vector<64x32xf32>
    %111 = vector.extract_strided_slice %110 {offsets = [0, 0], sizes = [16, 32], strides = [1, 1]} : vector<64x32xf32> to vector<16x32xf32>
    %112 = vector.extract_strided_slice %110 {offsets = [16, 0], sizes = [16, 32], strides = [1, 1]} : vector<64x32xf32> to vector<16x32xf32>
    %113 = arith.addf %111, %112 : vector<16x32xf32>
    %114 = vector.extract_strided_slice %110 {offsets = [32, 0], sizes = [16, 32], strides = [1, 1]} : vector<64x32xf32> to vector<16x32xf32>
    %115 = arith.addf %113, %114 : vector<16x32xf32>
    %116 = vector.extract_strided_slice %110 {offsets = [48, 0], sizes = [16, 32], strides = [1, 1]} : vector<64x32xf32> to vector<16x32xf32>
    %117 = arith.addf %115, %116 : vector<16x32xf32>
    %118 = vector.extract_strided_slice %10 {offsets = [0, 64], sizes = [16, 32], strides = [1, 1]} : vector<16x128xf32> to vector<16x32xf32>
    %119 = arith.addf %117, %118 : vector<16x32xf32>
    %120 = tpu.concatenate %47, %83, %119 in 0 : vector<16x32xf32>, vector<16x32xf32>, vector<16x32xf32> -> vector<48x32xf32>
    %121 = tpu.concatenate %0, %0, %0 in 0 : vector<16x32xf32>, vector<16x32xf32>, vector<16x32xf32> -> vector<48x32xf32>
    %122 = tpu.concatenate %11, %11, %11 in 0 : vector<16x32xf32>, vector<16x32xf32>, vector<16x32xf32> -> vector<48x32xf32>
    %c0_46 = arith.constant 0 : index
    %c0_47 = arith.constant 0 : index
    %123 = vector.load %arg7[%c0_46, %c0_47] : memref<32x32xf32, #tpu.memory_space<vmem>>, vector<32x32xf32>
    %cst_48 = arith.constant dense<0.000000e+00> : vector<48x32xf32>
    %124 = tpu.matmul %120, %123, %cst_48 {dimension_numbers = #tpu.dot_dimension_numbers<[1], [0], [0], [1], [0, 0, 1, 1], [], []>} : vector<48x32xf32>, vector<32x32xf32>, vector<48x32xf32> -> vector<48x32xf32>
    %125 = arith.addf %124, %122 : vector<48x32xf32>
    %126 = arith.negf %125 : vector<48x32xf32>
    %127 = math.exp %126 : vector<48x32xf32>
    %cst_49 = arith.constant 1.000000e+00 : f32
    %128 = vector.broadcast %cst_49 : f32 to vector<48x32xf32>
    %129 = arith.addf %128, %127 : vector<48x32xf32>
    %130 = arith.divf %128, %129 : vector<48x32xf32>
    %131 = math.tanh %120 : vector<48x32xf32>
    %132 = arith.mulf %131, %130 : vector<48x32xf32>
    %cst_50 = arith.constant 1.000000e+00 : f32
    %133 = vector.broadcast %cst_50 : f32 to vector<48x32xf32>
    %134 = arith.subf %133, %130 : vector<48x32xf32>
    %135 = arith.mulf %121, %134 : vector<48x32xf32>
    %136 = arith.addf %132, %135 : vector<48x32xf32>
    %c0_51 = arith.constant 0 : index
    %c0_52 = arith.constant 0 : index
    %137 = vector.load %arg8[%c0_51, %c0_52] : memref<32x256xf32, #tpu.memory_space<vmem>>, vector<32x256xf32>
    %cst_53 = arith.constant dense<0.000000e+00> : vector<48x256xf32>
    %138 = tpu.matmul %136, %137, %cst_53 {dimension_numbers = #tpu.dot_dimension_numbers<[1], [0], [0], [1], [0, 0, 1, 1], [], []>} : vector<48x32xf32>, vector<32x256xf32>, vector<48x256xf32> -> vector<48x256xf32>
    %c0_54 = arith.constant 0 : index
    %c0_55 = arith.constant 0 : index
    %139 = vector.load %arg9[%c0_54, %c0_55] : memref<1x256xf32, #tpu.memory_space<vmem>>, vector<1x256xf32>
    %140 = vector.broadcast %139 : vector<1x256xf32> to vector<48x256xf32>
    %141 = arith.addf %138, %140 : vector<48x256xf32>
    %142 = math.tanh %141 : vector<48x256xf32>
    %c0_56 = arith.constant 0 : index
    %c0_57 = arith.constant 0 : index
    %143 = vector.load %arg10[%c0_56, %c0_57] : memref<256x128xf32, #tpu.memory_space<vmem>>, vector<256x128xf32>
    %cst_58 = arith.constant dense<0.000000e+00> : vector<48x128xf32>
    %144 = tpu.matmul %142, %143, %cst_58 {dimension_numbers = #tpu.dot_dimension_numbers<[1], [0], [0], [1], [0, 0, 1, 1], [], []>} : vector<48x256xf32>, vector<256x128xf32>, vector<48x128xf32> -> vector<48x128xf32>
    %145 = vector.extract_strided_slice %144 {offsets = [0, 0], sizes = [48, 2], strides = [1, 1]} : vector<48x128xf32> to vector<48x2xf32>
    %146 = vector.extract_strided_slice %145 {offsets = [0, 0], sizes = [16, 2], strides = [1, 1]} : vector<48x2xf32> to vector<16x2xf32>
    %cst_59 = arith.constant dense<0.000000e+00> : vector<2xf32>
    %147 = vector.multi_reduction <add>, %146, %cst_59 [0] : vector<16x2xf32> to vector<2xf32>
    %148 = vector.shape_cast %147 : vector<2xf32> to vector<1x2xf32>
    %cst_60 = arith.constant 6.250000e-02 : f32
    %149 = vector.broadcast %cst_60 : f32 to vector<1x2xf32>
    %150 = arith.mulf %148, %149 : vector<1x2xf32>
    %151 = vector.extract_strided_slice %145 {offsets = [16, 0], sizes = [16, 2], strides = [1, 1]} : vector<48x2xf32> to vector<16x2xf32>
    %cst_61 = arith.constant dense<0.000000e+00> : vector<2xf32>
    %152 = vector.multi_reduction <add>, %151, %cst_61 [0] : vector<16x2xf32> to vector<2xf32>
    %153 = vector.shape_cast %152 : vector<2xf32> to vector<1x2xf32>
    %cst_62 = arith.constant 6.250000e-02 : f32
    %154 = vector.broadcast %cst_62 : f32 to vector<1x2xf32>
    %155 = arith.mulf %153, %154 : vector<1x2xf32>
    %156 = vector.extract_strided_slice %145 {offsets = [32, 0], sizes = [16, 2], strides = [1, 1]} : vector<48x2xf32> to vector<16x2xf32>
    %cst_63 = arith.constant dense<0.000000e+00> : vector<2xf32>
    %157 = vector.multi_reduction <add>, %156, %cst_63 [0] : vector<16x2xf32> to vector<2xf32>
    %158 = vector.shape_cast %157 : vector<2xf32> to vector<1x2xf32>
    %cst_64 = arith.constant 6.250000e-02 : f32
    %159 = vector.broadcast %cst_64 : f32 to vector<1x2xf32>
    %160 = arith.mulf %158, %159 : vector<1x2xf32>
    %161 = arith.maximumf %150, %155 : vector<1x2xf32>
    %162 = arith.maximumf %161, %160 : vector<1x2xf32>
    %163 = arith.subf %150, %162 : vector<1x2xf32>
    %164 = math.exp %163 : vector<1x2xf32>
    %165 = arith.subf %155, %162 : vector<1x2xf32>
    %166 = math.exp %165 : vector<1x2xf32>
    %167 = arith.subf %160, %162 : vector<1x2xf32>
    %168 = math.exp %167 : vector<1x2xf32>
    %169 = arith.addf %164, %166 : vector<1x2xf32>
    %170 = arith.addf %169, %168 : vector<1x2xf32>
    %cst_65 = arith.constant 0.000000e+00 : f32
    %171 = vector.broadcast %cst_65 : f32 to vector<16x32xf32>
    %172 = arith.divf %164, %170 : vector<1x2xf32>
    %cst_66 = arith.constant dense<0.000000e+00> : vector<1xf32>
    %173 = vector.multi_reduction <add>, %172, %cst_66 [1] : vector<1x2xf32> to vector<1xf32>
    %174 = vector.shape_cast %173 : vector<1xf32> to vector<1x1xf32>
    %cst_67 = arith.constant 5.000000e-01 : f32
    %175 = vector.broadcast %cst_67 : f32 to vector<1x1xf32>
    %176 = arith.mulf %174, %175 : vector<1x1xf32>
    %177 = vector.extract_strided_slice %136 {offsets = [0, 0], sizes = [16, 32], strides = [1, 1]} : vector<48x32xf32> to vector<16x32xf32>
    %178 = vector.broadcast %176 : vector<1x1xf32> to vector<16x32xf32>
    %179 = arith.mulf %178, %177 : vector<16x32xf32>
    %180 = arith.addf %171, %179 : vector<16x32xf32>
    %181 = arith.divf %166, %170 : vector<1x2xf32>
    %cst_68 = arith.constant dense<0.000000e+00> : vector<1xf32>
    %182 = vector.multi_reduction <add>, %181, %cst_68 [1] : vector<1x2xf32> to vector<1xf32>
    %183 = vector.shape_cast %182 : vector<1xf32> to vector<1x1xf32>
    %cst_69 = arith.constant 5.000000e-01 : f32
    %184 = vector.broadcast %cst_69 : f32 to vector<1x1xf32>
    %185 = arith.mulf %183, %184 : vector<1x1xf32>
    %186 = vector.extract_strided_slice %136 {offsets = [16, 0], sizes = [16, 32], strides = [1, 1]} : vector<48x32xf32> to vector<16x32xf32>
    %187 = vector.broadcast %185 : vector<1x1xf32> to vector<16x32xf32>
    %188 = arith.mulf %187, %186 : vector<16x32xf32>
    %189 = arith.addf %180, %188 : vector<16x32xf32>
    %190 = arith.divf %168, %170 : vector<1x2xf32>
    %cst_70 = arith.constant dense<0.000000e+00> : vector<1xf32>
    %191 = vector.multi_reduction <add>, %190, %cst_70 [1] : vector<1x2xf32> to vector<1xf32>
    %192 = vector.shape_cast %191 : vector<1xf32> to vector<1x1xf32>
    %cst_71 = arith.constant 5.000000e-01 : f32
    %193 = vector.broadcast %cst_71 : f32 to vector<1x1xf32>
    %194 = arith.mulf %192, %193 : vector<1x1xf32>
    %195 = vector.extract_strided_slice %136 {offsets = [32, 0], sizes = [16, 32], strides = [1, 1]} : vector<48x32xf32> to vector<16x32xf32>
    %196 = vector.broadcast %194 : vector<1x1xf32> to vector<16x32xf32>
    %197 = arith.mulf %196, %195 : vector<16x32xf32>
    %198 = arith.addf %189, %197 : vector<16x32xf32>
    %c0_72 = arith.constant 0 : index
    %c0_73 = arith.constant 0 : index
    %199 = vector.load %arg11[%c0_72, %c0_73] : memref<16x32xf32, #tpu.memory_space<vmem>>, vector<16x32xf32>
    tpu.vector_store %arg11[%c0_72, %c0_73], %198 {strides = array<i32>} : memref<16x32xf32, #tpu.memory_space<vmem>>, vector<16x32xf32>,
    return
  }
}

</mosaic_0001>

<llo_original>
// kernel: tpu_custom_call.1
$region0: #{tpu_custom_call.1}
  #allocation0 [shape = 'u32[]', space=smem, size = 0x4, offset = 0x4, fixed_abs, tag = 'smem constant byte address 0x4 - core index']
  #allocation1 [shape = 'u32[72,128]{1,0:T(1,128)}', space=vmem, size = 0x9000, scoped, tag = 'internal scratch']
  %s0 = inlined_call_operand.hbm [shape: f32[16,32], index: 0, kind: input, shape index: {}]
  %s1 = inlined_call_operand.hbm [shape: f32[64,128], index: 1, kind: input, shape index: {}]
  %s2 = inlined_call_operand.vmem [shape: f32[3,64,64], index: 2, kind: input, shape index: {}]
  %s3 = inlined_call_operand.vmem [shape: f32[128,288], index: 3, kind: input, shape index: {}]
  %s4 = inlined_call_operand.vmem [shape: f32[64,288], index: 4, kind: input, shape index: {}]
  %s5 = inlined_call_operand.vmem [shape: f32[32,128], index: 5, kind: input, shape index: {}]
  %s6 = inlined_call_operand.hbm [shape: f32[1,128], index: 6, kind: input, shape index: {}]
  %s7 = inlined_call_operand.hbm [shape: f32[32,32], index: 7, kind: input, shape index: {}]
  %s8 = inlined_call_operand.hbm [shape: f32[32,256], index: 8, kind: input, shape index: {}]
  %s9 = inlined_call_operand.vmem [shape: f32[1,256], index: 9, kind: input, shape index: {}]
  %s10 = inlined_call_operand.vmem [shape: f32[256,128], index: 10, kind: input, shape index: {}]
  %s11 = inlined_call_operand.hbm [shape: f32[16,32], index: 11, kind: output, shape index: {}]
  %s12 = sld [smem:[#allocation0]]
  $region74: #{tpu_custom_call.1} parent=0
    _
  %s14 = ssub.s32 1, %s12
  %s15 = scalar_select 0, %s14, %s12
  $region1: #{tpu_custom_call.1} parent=0
    #allocation2 [shape = 'u8[8192]{0}', space=vmem, size = 0x2000, scoped, tag = 'input window, operand 0, single buffered']
    #allocation3 [shape = 's32[1]{0}', space=sflag, size = 0x4, scoped, tag = 'scoped memory for tpu_custom_call.1']
    #allocation4 [shape = 's32[1]{0}', space=sflag, size = 0x4, scoped, tag = 'scoped memory for tpu_custom_call.1']
    #allocation5 [shape = 'u8[32768]{0}', space=vmem, size = 0x8000, scoped, tag = 'input window, operand 1, single buffered']
    #allocation6 [shape = 's32[1]{0}', space=sflag, size = 0x4, scoped, tag = 'scoped memory for tpu_custom_call.1']
    #allocation7 [shape = 'u8[512]{0}', space=vmem, size = 0x400, scoped, tag = 'input window, operand 6, single buffered']
    #allocation8 [shape = 'u8[16384]{0}', space=vmem, size = 0x4000, scoped, tag = 'input window, operand 7, single buffered']
    #allocation9 [shape = 's32[1]{0}', space=sflag, size = 0x4, scoped, tag = 'scoped memory for tpu_custom_call.1']
    #allocation10 [shape = 'u8[32768]{0}', space=vmem, size = 0x8000, scoped, tag = 'input window, operand 8, single buffered']
    #allocation11 [shape = 'u8[8192]{0}', space=vmem, size = 0x2000, scoped, tag = 'output window, operand 0, single buffered']
    %16 = vsyncpa [#allocation3], 0
    %17 = vsyncpa [#allocation6], 0
    %18 = vsyncpa [#allocation9], 0
    %19 = vsyncpa [#allocation4], 0
    // Predicated region
    $region2: #{tpu_custom_call.1} parent=1 // pred_check
      _
    $region3: #{tpu_custom_call.1} parent=1 // pred_check_branch
      %21 = sbr.rel (0) target = $region5
    $region4: #{tpu_custom_call.1} parent=1 // pred_region
      %23 = vsyncadd [#allocation3], 0
      %s24 = sshll.u32 %s0, 4
      %s25 = int_to_ptr.hbm [resolvable:$true] %s24
      %s26 = sshll.u32 [#allocation2], 4
      %s27 = int_to_ptr.vmem [resolvable:$true] %s26
      %32 = dma.hbm_to_vmem [thread:$0]  %s25, 256, %s27, [#allocation3], 128, 128, 8
    $region5: #{tpu_custom_call.1} parent=1 // pred_fallthru
      _
    // Predicated region
    $region6: #{tpu_custom_call.1} parent=1 // pred_check
      _
    $region7: #{tpu_custom_call.1} parent=1 // pred_check_branch
      %34 = sbr.rel (0) target = $region9
    $region8: #{tpu_custom_call.1} parent=1 // pred_region
      %36 = vsyncadd [#allocation6], 0
      %s37 = sshll.u32 %s1, 4
      %s38 = int_to_ptr.hbm [resolvable:$true] %s37
      %s39 = sshll.u32 [#allocation5], 4
      %s40 = int_to_ptr.vmem [resolvable:$true] %s39
      %45 = dma.hbm_to_vmem [thread:$0]  %s38, 1024, %s40, [#allocation6], 128, 128, 8
    $region9: #{tpu_custom_call.1} parent=1 // pred_fallthru
      _
    // Predicated region
    $region10: #{tpu_custom_call.1} parent=1 // pred_check
      _
    $region11: #{tpu_custom_call.1} parent=1 // pred_check_branch
      %47 = sbr.rel (0) target = $region13
    $region12: #{tpu_custom_call.1} parent=1 // pred_region
      _
    $region13: #{tpu_custom_call.1} parent=1 // pred_fallthru
      _
    // Predicated region
    $region14: #{tpu_custom_call.1} parent=1 // pred_check
      _
    $region15: #{tpu_custom_call.1} parent=1 // pred_check_branch
      %49 = sbr.rel (0) target = $region17
    $region16: #{tpu_custom_call.1} parent=1 // pred_region
      _
    $region17: #{tpu_custom_call.1} parent=1 // pred_fallthru
      _
    // Predicated region
    $region18: #{tpu_custom_call.1} parent=1 // pred_check
      _
    $region19: #{tpu_custom_call.1} parent=1 // pred_check_branch
      %51 = sbr.rel (0) target = $region21
    $region20: #{tpu_custom_call.1} parent=1 // pred_region
      _
    $region21: #{tpu_custom_call.1} parent=1 // pred_fallthru
      _
    // Predicated region
    $region22: #{tpu_custom_call.1} parent=1 // pred_check
      _
    $region23: #{tpu_custom_call.1} parent=1 // pred_check_branch
      %53 = sbr.rel (0) target = $region25
    $region24: #{tpu_custom_call.1} parent=1 // pred_region
      _
    $region25: #{tpu_custom_call.1} parent=1 // pred_fallthru
      _
    // Predicated region
    $region26: #{tpu_custom_call.1} parent=1 // pred_check
      _
    $region27: #{tpu_custom_call.1} parent=1 // pred_check_branch
      %55 = sbr.rel (0) target = $region29
    $region28: #{tpu_custom_call.1} parent=1 // pred_region
      %57 = vsyncadd [#allocation6], 0
      %s59 = sshll.u32 %s6, 4
      %s60 = int_to_ptr.hbm [resolvable:$true] %s59
      %s61 = sshll.u32 [#allocation7], 4
      %s62 = int_to_ptr.vmem [resolvable:$true] %s61
      %64 = dma.hbm_to_vmem [thread:$0]  %s60, 16, %s62, [#allocation6]
    $region29: #{tpu_custom_call.1} parent=1 // pred_fallthru
      _
    // Predicated region
    $region30: #{tpu_custom_call.1} parent=1 // pred_check
      _
    $region31: #{tpu_custom_call.1} parent=1 // pred_check_branch
      %66 = sbr.rel (0) target = $region33
    $region32: #{tpu_custom_call.1} parent=1 // pred_region
      %68 = vsyncadd [#allocation9], 0
      %s69 = sshll.u32 %s7, 4
      %s70 = int_to_ptr.hbm [resolvable:$true] %s69
      %s71 = sshll.u32 [#allocation8], 4
      %s72 = int_to_ptr.vmem [resolvable:$true] %s71
      %77 = dma.hbm_to_vmem [thread:$0]  %s70, 512, %s72, [#allocation9], 128, 128, 8
    $region33: #{tpu_custom_call.1} parent=1 // pred_fallthru
      _
    // Predicated region
    $region34: #{tpu_custom_call.1} parent=1 // pred_check
      _
    $region35: #{tpu_custom_call.1} parent=1 // pred_check_branch
      %79 = sbr.rel (0) target = $region37
    $region36: #{tpu_custom_call.1} parent=1 // pred_region
      %81 = vsyncadd [#allocation9], 0
      %s82 = sshll.u32 %s8, 4
      %s83 = int_to_ptr.hbm [resolvable:$true] %s82
      %s84 = sshll.u32 [#allocation10], 4
      %s85 = int_to_ptr.vmem [resolvable:$true] %s84
      %90 = dma.hbm_to_vmem [thread:$0]  %s83, 1024, %s85, [#allocation9], 256, 256, 16
    $region37: #{tpu_custom_call.1} parent=1 // pred_fallthru
      _
    // Predicated region
    $region38: #{tpu_custom_call.1} parent=1 // pred_check
      _
    $region39: #{tpu_custom_call.1} parent=1 // pred_check_branch
      %92 = sbr.rel (0) target = $region41
    $region40: #{tpu_custom_call.1} parent=1 // pred_region
      _
    $region41: #{tpu_custom_call.1} parent=1 // pred_fallthru
      _
    // Predicated region
    $region42: #{tpu_custom_call.1} parent=1 // pred_check
      _
    $region43: #{tpu_custom_call.1} parent=1 // pred_check_branch
      %94 = sbr.rel (0) target = $region45
    $region44: #{tpu_custom_call.1} parent=1 // pred_region
      _
    $region45: #{tpu_custom_call.1} parent=1 // pred_fallthru
      _
    // Predicated region
    $region46: #{tpu_custom_call.1} parent=1 // pred_check
      _
    $region47: #{tpu_custom_call.1} parent=1 // pred_check_branch
      %96 = sbr.rel (0) target = $region49
    $region48: #{tpu_custom_call.1} parent=1 // pred_region
      %98 = dma.done [#allocation3], 256
    $region49: #{tpu_custom_call.1} parent=1 // pred_fallthru
      _
    // Predicated region
    $region50: #{tpu_custom_call.1} parent=1 // pred_check
      _
    $region51: #{tpu_custom_call.1} parent=1 // pred_check_branch
      %100 = sbr.rel (0) target = $region53
    $region52: #{tpu_custom_call.1} parent=1 // pred_region
      %102 = dma.done [#allocation6], 1024
    $region53: #{tpu_custom_call.1} parent=1 // pred_fallthru
      _
    // Predicated region
    $region54: #{tpu_custom_call.1} parent=1 // pred_check
      _
    $region55: #{tpu_custom_call.1} parent=1 // pred_check_branch
      %104 = sbr.rel (0) target = $region57
    $region56: #{tpu_custom_call.1} parent=1 // pred_region
      %106 = dma.done [#allocation6], 16
    $region57: #{tpu_custom_call.1} parent=1 // pred_fallthru
      _
    // Predicated region
    $region58: #{tpu_custom_call.1} parent=1 // pred_check
      _
    $region59: #{tpu_custom_call.1} parent=1 // pred_check_branch
      %108 = sbr.rel (0) target = $region61
    $region60: #{tpu_custom_call.1} parent=1 // pred_region
      %110 = dma.done [#allocation9], 512
    $region61: #{tpu_custom_call.1} parent=1 // pred_fallthru
      _
    // Predicated region
    $region62: #{tpu_custom_call.1} parent=1 // pred_check
      _
    $region63: #{tpu_custom_call.1} parent=1 // pred_check_branch
      %112 = sbr.rel (0) target = $region65
    $region64: #{tpu_custom_call.1} parent=1 // pred_region
      %114 = dma.done [#allocation9], 1024
    $region65: #{tpu_custom_call.1} parent=1 // pred_fallthru
      _
    %v115 = vld [vmem:[#allocation2] sm:$0xff]
    %v116 = vld [vmem:[#allocation2 + $0x8] sm:$0xff]
    %v117 = vld [vmem:[#allocation5] sm:$0xff]
    %v118 = vld [vmem:[#allocation5 + $0x8] sm:$0xff]
    %v119 = vld [vmem:[#allocation5 + $0x10] sm:$0xff]
    %v120 = vld [vmem:[#allocation5 + $0x18] sm:$0xff]
    %v121 = vld [vmem:[#allocation5 + $0x20] sm:$0xff]
    %v122 = vld [vmem:[#allocation5 + $0x28] sm:$0xff]
    %v123 = vld [vmem:[#allocation5 + $0x30] sm:$0xff]
    %v124 = vld [vmem:[#allocation5 + $0x38] sm:$0xff]
    %v125 = vld [vmem:[%s3] sm:$0xff]
    %v126 = vld [vmem:[%s3 + $0x8] sm:$0xff]
    %v127 = vld [vmem:[%s3 + $0x10] sm:$0xff]
    %v128 = vld [vmem:[%s3 + $0x18] sm:$0xff]
    %v129 = vld [vmem:[%s3 + $0x20] sm:$0xff]
    %v130 = vld [vmem:[%s3 + $0x28] sm:$0xff]
    %v131 = vld [vmem:[%s3 + $0x30] sm:$0xff]
    %v132 = vld [vmem:[%s3 + $0x38] sm:$0xff]
    %v133 = vld [vmem:[%s3 + $0x40] sm:$0xff]
    %v134 = vld [vmem:[%s3 + $0x48] sm:$0xff]
    %v135 = vld [vmem:[%s3 + $0x50] sm:$0xff]
    %v136 = vld [vmem:[%s3 + $0x58] sm:$0xff]
    %v137 = vld [vmem:[%s3 + $0x60] sm:$0xff]
    %v138 = vld [vmem:[%s3 + $0x68] sm:$0xff]
    %v139 = vld [vmem:[%s3 + $0x70] sm:$0xff]
    %v140 = vld [vmem:[%s3 + $0x78] sm:$0xff]
    %v141 = vld [vmem:[%s3 + $0x80] sm:$0xff]
    %v142 = vld [vmem:[%s3 + $0x88] sm:$0xff]
    %v143 = vld [vmem:[%s3 + $0x90] sm:$0xff]
    %v144 = vld [vmem:[%s3 + $0x98] sm:$0xff]
    %v145 = vld [vmem:[%s3 + $0xa0] sm:$0xff]
    %v146 = vld [vmem:[%s3 + $0xa8] sm:$0xff]
    %v147 = vld [vmem:[%s3 + $0xb0] sm:$0xff]
    %v148 = vld [vmem:[%s3 + $0xb8] sm:$0xff]
    %v149 = vld [vmem:[%s3 + $0xc0] sm:$0xff]
    %v150 = vld [vmem:[%s3 + $0xc8] sm:$0xff]
    %v151 = vld [vmem:[%s3 + $0xd0] sm:$0xff]
    %v152 = vld [vmem:[%s3 + $0xd8] sm:$0xff]
    %v153 = vld [vmem:[%s3 + $0xe0] sm:$0xff]
    %v154 = vld [vmem:[%s3 + $0xe8] sm:$0xff]
    %v155 = vld [vmem:[%s3 + $0xf0] sm:$0xff]
    %v156 = vld [vmem:[%s3 + $0xf8] sm:$0xff]
    %v157 = vld [vmem:[%s3 + $0x100] sm:$0xff]
    %v158 = vld [vmem:[%s3 + $0x108] sm:$0xff]
    %v159 = vld [vmem:[%s3 + $0x110] sm:$0xff]
    %v160 = vld [vmem:[%s3 + $0x118] sm:$0xff]
    %v161 = vld [vmem:[%s3 + $0x120] sm:$0xff]
    %v162 = vld [vmem:[%s3 + $0x128] sm:$0xff]
    %v163 = vld [vmem:[%s3 + $0x130] sm:$0xff]
    %v164 = vld [vmem:[%s3 + $0x138] sm:$0xff]
    %v165 = vld [vmem:[%s3 + $0x140] sm:$0xff]
    %v166 = vld [vmem:[%s3 + $0x148] sm:$0xff]
    %v167 = vld [vmem:[%s3 + $0x150] sm:$0xff]
    %v168 = vld [vmem:[%s3 + $0x158] sm:$0xff]
    %v169 = vld [vmem:[%s3 + $0x160] sm:$0xff]
    %v170 = vld [vmem:[%s3 + $0x168] sm:$0xff]
    %v171 = vld [vmem:[%s3 + $0x170] sm:$0xff]
    %v172 = vld [vmem:[%s3 + $0x178] sm:$0xff]
    %v173 = vld [vmem:[%s4] sm:$0xff]
    %v174 = vld [vmem:[%s4 + $0x8] sm:$0xff]
    %v175 = vld [vmem:[%s4 + $0x10] sm:$0xff]
    %v176 = vld [vmem:[%s4 + $0x18] sm:$0xff]
    %v177 = vld [vmem:[%s4 + $0x20] sm:$0xff]
    %v178 = vld [vmem:[%s4 + $0x28] sm:$0xff]
    %v179 = vld [vmem:[%s4 + $0x30] sm:$0xff]
    %v180 = vld [vmem:[%s4 + $0x38] sm:$0xff]
    %v181 = vld [vmem:[%s4 + $0x40] sm:$0xff]
    %v182 = vld [vmem:[%s4 + $0x48] sm:$0xff]
    %v183 = vld [vmem:[%s4 + $0x50] sm:$0xff]
    %v184 = vld [vmem:[%s4 + $0x58] sm:$0xff]
    %v185 = vld [vmem:[%s4 + $0x60] sm:$0xff]
    %v186 = vld [vmem:[%s4 + $0x68] sm:$0xff]
    %v187 = vld [vmem:[%s4 + $0x70] sm:$0xff]
    %v188 = vld [vmem:[%s4 + $0x78] sm:$0xff]
    %v189 = vld [vmem:[%s4 + $0x80] sm:$0xff]
    %v190 = vld [vmem:[%s4 + $0x88] sm:$0xff]
    %v191 = vld [vmem:[%s4 + $0x90] sm:$0xff]
    %v192 = vld [vmem:[%s4 + $0x98] sm:$0xff]
    %v193 = vld [vmem:[%s4 + $0xa0] sm:$0xff]
    %v194 = vld [vmem:[%s4 + $0xa8] sm:$0xff]
    %v195 = vld [vmem:[%s4 + $0xb0] sm:$0xff]
    %v196 = vld [vmem:[%s4 + $0xb8] sm:$0xff]
    %197 = vmatpush.msra.mxu0 %v170
    %198 = vmatpush.msra.mxu0 %v167
    %199 = vmatpush.msra.mxu0 %v164
    %200 = vmatpush.msra.mxu0 %v161
    %201 = vmatpush.msra.mxu0 %v158
    %202 = vmatpush.msra.mxu0 %v155
    %203 = vmatpush.msra.mxu0 %v152
    %204 = vmatpush.msra.mxu0 %v149
    %205 = vmatpush.msra.mxu0 %v146
    %206 = vmatpush.msra.mxu0 %v143
    %207 = vmatpush.msra.mxu0 %v140
    %208 = vmatpush.msra.mxu0 %v137
    %209 = vmatpush.msra.mxu0 %v134
    %210 = vmatpush.msra.mxu0 %v131
    %211 = vmatpush.msra.mxu0 %v128
    %212 = vmatpush.msra.mxu0 %v125
    %213 = vmatmul.f32.gmra.mxu0 %v117
    %v214 = vpop.f32.mrf.mxu0
    %v215 = vadd.f32 %v173, %v214
    %216 = vmatmul.f32.gmra.mxu0 %v118
    %v217 = vpop.f32.mrf.mxu0
    %v218 = vadd.f32 %v176, %v217
    %219 = vmatmul.f32.gmra.mxu0 %v119
    %v220 = vpop.f32.mrf.mxu0
    %v221 = vadd.f32 %v179, %v220
    %222 = vmatmul.f32.gmra.mxu0 %v120
    %v223 = vpop.f32.mrf.mxu0
    %v224 = vadd.f32 %v182, %v223
    %225 = vmatmul.f32.gmra.mxu0 %v121
    %v226 = vpop.f32.mrf.mxu0
    %v227 = vadd.f32 %v185, %v226
    %228 = vmatmul.f32.gmra.mxu0 %v122
    %v229 = vpop.f32.mrf.mxu0
    %v230 = vadd.f32 %v188, %v229
    %231 = vmatmul.f32.gmra.mxu0 %v123
    %v232 = vpop.f32.mrf.mxu0
    %v233 = vadd.f32 %v191, %v232
    %234 = vmatmul.f32.gmra.mxu0 %v124
    %v235 = vpop.f32.mrf.mxu0
    %v236 = vadd.f32 %v194, %v235
    %237 = vdwg.mxu0
    %238 = vmatpush.msra.mxu0 %v171
    %239 = vmatpush.msra.mxu0 %v168
    %240 = vmatpush.msra.mxu0 %v165
    %241 = vmatpush.msra.mxu0 %v162
    %242 = vmatpush.msra.mxu0 %v159
    %243 = vmatpush.msra.mxu0 %v156
    %244 = vmatpush.msra.mxu0 %v153
    %245 = vmatpush.msra.mxu0 %v150
    %246 = vmatpush.msra.mxu0 %v147
    %247 = vmatpush.msra.mxu0 %v144
    %248 = vmatpush.msra.mxu0 %v141
    %249 = vmatpush.msra.mxu0 %v138
    %250 = vmatpush.msra.mxu0 %v135
    %251 = vmatpush.msra.mxu0 %v132
    %252 = vmatpush.msra.mxu0 %v129
    %253 = vmatpush.msra.mxu0 %v126
    %254 = vmatmul.f32.gmra.mxu0 %v117
    %v255 = vpop.f32.mrf.mxu0
    %v256 = vadd.f32 %v174, %v255
    %257 = vmatmul.f32.gmra.mxu0 %v118
    %v258 = vpop.f32.mrf.mxu0
    %v259 = vadd.f32 %v177, %v258
    %260 = vmatmul.f32.gmra.mxu0 %v119
    %v261 = vpop.f32.mrf.mxu0
    %v262 = vadd.f32 %v180, %v261
    %263 = vmatmul.f32.gmra.mxu0 %v120
    %v264 = vpop.f32.mrf.mxu0
    %v265 = vadd.f32 %v183, %v264
    %266 = vmatmul.f32.gmra.mxu0 %v121
    %v267 = vpop.f32.mrf.mxu0
    %v268 = vadd.f32 %v186, %v267
    %269 = vmatmul.f32.gmra.mxu0 %v122
    %v270 = vpop.f32.mrf.mxu0
    %v271 = vadd.f32 %v189, %v270
    %272 = vmatmul.f32.gmra.mxu0 %v123
    %v273 = vpop.f32.mrf.mxu0
    %v274 = vadd.f32 %v192, %v273
    %275 = vmatmul.f32.gmra.mxu0 %v124
    %v276 = vpop.f32.mrf.mxu0
    %v277 = vadd.f32 %v195, %v276
    %278 = vdwg.mxu0
    %279 = vmatpush.msra.mxu0 %v172
    %280 = vmatpush.msra.mxu0 %v169
    %281 = vmatpush.msra.mxu0 %v166
    %282 = vmatpush.msra.mxu0 %v163
    %283 = vmatpush.msra.mxu0 %v160
    %284 = vmatpush.msra.mxu0 %v157
    %285 = vmatpush.msra.mxu0 %v154
    %286 = vmatpush.msra.mxu0 %v151
    %287 = vmatpush.msra.mxu0 %v148
    %288 = vmatpush.msra.mxu0 %v145
    %289 = vmatpush.msra.mxu0 %v142
    %290 = vmatpush.msra.mxu0 %v139
    %291 = vmatpush.msra.mxu0 %v136
    %292 = vmatpush.msra.mxu0 %v133
    %293 = vmatpush.msra.mxu0 %v130
    %294 = vmatpush.msra.mxu0 %v127
    %295 = vmatmul.f32.gmra.mxu0 %v117
    %v296 = vpop.f32.mrf.mxu0
    %v297 = vadd.f32 %v175, %v296
    %298 = vmatmul.f32.gmra.mxu0 %v118
    %v299 = vpop.f32.mrf.mxu0
    %v300 = vadd.f32 %v178, %v299
    %301 = vmatmul.f32.gmra.mxu0 %v119
    %v302 = vpop.f32.mrf.mxu0
    %v303 = vadd.f32 %v181, %v302
    %304 = vmatmul.f32.gmra.mxu0 %v120
    %v305 = vpop.f32.mrf.mxu0
    %v306 = vadd.f32 %v184, %v305
    %307 = vmatmul.f32.gmra.mxu0 %v121
    %v308 = vpop.f32.mrf.mxu0
    %v309 = vadd.f32 %v187, %v308
    %310 = vmatmul.f32.gmra.mxu0 %v122
    %v311 = vpop.f32.mrf.mxu0
    %v312 = vadd.f32 %v190, %v311
    %313 = vmatmul.f32.gmra.mxu0 %v123
    %v314 = vpop.f32.mrf.mxu0
    %v315 = vadd.f32 %v193, %v314
    %316 = vmatmul.f32.gmra.mxu0 %v124
    %v317 = vpop.f32.mrf.mxu0
    %v318 = vadd.f32 %v196, %v317
    %319 = vdwg.mxu0
    %v320 = vld [vmem:[%s5] sm:$0xff]
    %v321 = vld [vmem:[%s5 + $0x8] sm:$0xff]
    %v322 = vld [vmem:[%s5 + $0x10] sm:$0xff]
    %v323 = vld [vmem:[%s5 + $0x18] sm:$0xff]
    %v324 = vld [vmem:[#allocation7] sm:$0x1]
    %v326 = vperm.slane %v324, 0
    %vm328 = vcmask 261120
    %v330 = vsel %vm328, %v115, 0
    %v333 = vsel %vm328, %v116, 0
    %335 = vmatpush.msra.mxu0 0.0
    %336 = vmatpush.msra.mxu0 0.0
    %337 = vmatpush.msra.mxu0 0.0
    %338 = vmatpush.msra.mxu0 0.0
    %339 = vmatpush.msra.mxu0 0.0
    %340 = vmatpush.msra.mxu0 0.0
    %341 = vmatpush.msra.mxu0 0.0
    %342 = vmatpush.msra.mxu0 0.0
    %343 = vmatpush.msra.mxu0 0.0
    %344 = vmatpush.msra.mxu0 0.0
    %345 = vmatpush.msra.mxu0 0.0
    %346 = vmatpush.msra.mxu0 0.0
    %347 = vmatpush.msra.mxu0 %v323
    %348 = vmatpush.msra.mxu0 %v322
    %349 = vmatpush.msra.mxu0 %v321
    %350 = vmatpush.msra.mxu0 %v320
    %351 = vmatmul.f32.gmra.mxu0 %v330
    %v352 = vpop.f32.mrf.mxu0
    %v353 = vadd.f32 %v326, %v352
    %354 = vmatmul.f32.gmra.mxu0 %v333
    %v355 = vpop.f32.mrf.mxu0
    %v356 = vadd.f32 %v326, %v355
    %357 = vdwg.mxu0
    %v358 = vld [vmem:[%s2] sm:$0xff]
    %v359 = vld [vmem:[%s2 + $0x8] sm:$0xff]
    %v360 = vld [vmem:[%s2 + $0x10] sm:$0xff]
    %v361 = vld [vmem:[%s2 + $0x18] sm:$0xff]
    %v362 = vld [vmem:[%s2 + $0x20] sm:$0xff]
    %v363 = vld [vmem:[%s2 + $0x28] sm:$0xff]
    %v364 = vld [vmem:[%s2 + $0x30] sm:$0xff]
    %v365 = vld [vmem:[%s2 + $0x38] sm:$0xff]
    %374 = vrot.lane.b32.xlu0 %v215, 96
    %v375 = vpop.permute.xlu0 %374
    %376 = vrot.lane.b32.xlu0 %v218, 96
    %v377 = vpop.permute.xlu0 %376
    %378 = vrot.lane.b32.xlu0 %v221, 96
    %v379 = vpop.permute.xlu0 %378
    %380 = vrot.lane.b32.xlu0 %v224, 96
    %v381 = vpop.permute.xlu0 %380
    %382 = vrot.lane.b32.xlu0 %v227, 96
    %v383 = vpop.permute.xlu0 %382
    %384 = vrot.lane.b32.xlu0 %v230, 96
    %v385 = vpop.permute.xlu0 %384
    %386 = vrot.lane.b32.xlu0 %v233, 96
    %v387 = vpop.permute.xlu0 %386
    %388 = vrot.lane.b32.xlu0 %v236, 96
    %v389 = vpop.permute.xlu0 %388
    %v390 = vsel %vm328, %v215, 0
    %v392 = vsel %vm328, %v218, 0
    %v394 = vsel %vm328, %v221, 0
    %v396 = vsel %vm328, %v224, 0
    %v398 = vsel %vm328, %v227, 0
    %v400 = vsel %vm328, %v230, 0
    %v402 = vsel %vm328, %v233, 0
    %v404 = vsel %vm328, %v236, 0
    %v406 = vsel %vm328, %v375, 0
    %v408 = vsel %vm328, %v377, 0
    %v410 = vsel %vm328, %v379, 0
    %v412 = vsel %vm328, %v381, 0
    %v414 = vsel %vm328, %v383, 0
    %v416 = vsel %vm328, %v385, 0
    %v418 = vsel %vm328, %v387, 0
    %v420 = vsel %vm328, %v389, 0
    %422 = vmatpush.xpose.msra.mxu0 0.0
    %423 = vmatpush.xpose.msra.mxu0 0.0
    %424 = vmatpush.xpose.msra.mxu0 0.0
    %425 = vmatpush.xpose.msra.mxu0 0.0
    %426 = vmatpush.xpose.msra.mxu0 0.0
    %427 = vmatpush.xpose.msra.mxu0 0.0
    %428 = vmatpush.xpose.msra.mxu0 0.0
    %429 = vmatpush.xpose.msra.mxu0 0.0
    %430 = vmatpush.xpose.msra.mxu0 %v420
    %431 = vmatpush.xpose.msra.mxu0 %v418
    %432 = vmatpush.xpose.msra.mxu0 %v416
    %433 = vmatpush.xpose.msra.mxu0 %v414
    %434 = vmatpush.xpose.msra.mxu0 %v412
    %435 = vmatpush.xpose.msra.mxu0 %v410
    %436 = vmatpush.xpose.msra.mxu0 %v408
    %437 = vmatpush.xpose.msra.mxu0 %v406
    %438 = vmatmul.f32.gmra.mxu0 %v390
    %v439 = vpop.f32.mrf.mxu0
    %v440 = vadd.f32 0.0, %v439
    %441 = vmatmul.f32.gmra.mxu0 %v392
    %v442 = vpop.f32.mrf.mxu0
    %v443 = vadd.f32 0.0, %v442
    %444 = vmatmul.f32.gmra.mxu0 %v394
    %v445 = vpop.f32.mrf.mxu0
    %v446 = vadd.f32 0.0, %v445
    %447 = vmatmul.f32.gmra.mxu0 %v396
    %v448 = vpop.f32.mrf.mxu0
    %v449 = vadd.f32 0.0, %v448
    %450 = vmatmul.f32.gmra.mxu0 %v398
    %v451 = vpop.f32.mrf.mxu0
    %v452 = vadd.f32 0.0, %v451
    %453 = vmatmul.f32.gmra.mxu0 %v400
    %v454 = vpop.f32.mrf.mxu0
    %v455 = vadd.f32 0.0, %v454
    %456 = vmatmul.f32.gmra.mxu0 %v402
    %v457 = vpop.f32.mrf.mxu0
    %v458 = vadd.f32 0.0, %v457
    %459 = vmatmul.f32.gmra.mxu0 %v404
    %v460 = vpop.f32.mrf.mxu0
    %v461 = vadd.f32 0.0, %v460
    %462 = vdwg.mxu0
    %vm463 = vcmp.gt.f32.partialorder %v358, 0.0
    %vm464 = vcmp.gt.f32.partialorder %v359, 0.0
    %vm465 = vcmp.gt.f32.partialorder %v360, 0.0
    %vm466 = vcmp.gt.f32.partialorder %v361, 0.0
    %vm467 = vcmp.gt.f32.partialorder %v362, 0.0
    %vm468 = vcmp.gt.f32.partialorder %v363, 0.0
    %vm469 = vcmp.gt.f32.partialorder %v364, 0.0
    %vm470 = vcmp.gt.f32.partialorder %v365, 0.0
    %v471 = vsel %vm463, %v440, -1e+30
    %v472 = vsel %vm464, %v443, -1e+30
    %v473 = vsel %vm465, %v446, -1e+30
    %v474 = vsel %vm466, %v449, -1e+30
    %v475 = vsel %vm467, %v452, -1e+30
    %v476 = vsel %vm468, %v455, -1e+30
    %v477 = vsel %vm469, %v458, -1e+30
    %v478 = vsel %vm470, %v461, -1e+30
    %vm479 = vcmask 523264
    %v480 = vsel %vm479, %v471, -inf
    %481 = vmax.xlane.f32.xlu0 %v480
    %v482 = vpop.xlane.xlu0 %481
    %v483 = vsel %vm479, %v472, -inf
    %484 = vmax.xlane.f32.xlu0 %v483
    %v485 = vpop.xlane.xlu0 %484
    %v486 = vsel %vm479, %v473, -inf
    %487 = vmax.xlane.f32.xlu0 %v486
    %v488 = vpop.xlane.xlu0 %487
    %v489 = vsel %vm479, %v474, -inf
    %490 = vmax.xlane.f32.xlu0 %v489
    %v491 = vpop.xlane.xlu0 %490
    %v492 = vsel %vm479, %v475, -inf
    %493 = vmax.xlane.f32.xlu0 %v492
    %v494 = vpop.xlane.xlu0 %493
    %v495 = vsel %vm479, %v476, -inf
    %496 = vmax.xlane.f32.xlu0 %v495
    %v497 = vpop.xlane.xlu0 %496
    %v498 = vsel %vm479, %v477, -inf
    %499 = vmax.xlane.f32.xlu0 %v498
    %v500 = vpop.xlane.xlu0 %499
    %v501 = vsel %vm479, %v478, -inf
    %502 = vmax.xlane.f32.xlu0 %v501
    %v503 = vpop.xlane.xlu0 %502
    %v504 = vsub.f32 %v471, %v482
    %v505 = vsub.f32 %v472, %v485
    %v506 = vsub.f32 %v473, %v488
    %v507 = vsub.f32 %v474, %v491
    %v508 = vsub.f32 %v475, %v494
    %v509 = vsub.f32 %v476, %v497
    %v510 = vsub.f32 %v477, %v500
    %v511 = vsub.f32 %v478, %v503
    %v512 = vmul.f32 %v504, 1.442695
    %v513 = vpow.pop %v512
    %v514 = vmul.f32 %v505, 1.442695
    %v515 = vpow.pop %v514
    %v516 = vmul.f32 %v506, 1.442695
    %v517 = vpow.pop %v516
    %v518 = vmul.f32 %v507, 1.442695
    %v519 = vpow.pop %v518
    %v520 = vmul.f32 %v508, 1.442695
    %v521 = vpow.pop %v520
    %v522 = vmul.f32 %v509, 1.442695
    %v523 = vpow.pop %v522
    %v524 = vmul.f32 %v510, 1.442695
    %v525 = vpow.pop %v524
    %v526 = vmul.f32 %v511, 1.442695
    %v527 = vpow.pop %v526
    %v528 = vsel %vm463, %v513, 0.0
    %v529 = vsel %vm464, %v515, 0.0
    %v530 = vsel %vm465, %v517, 0.0
    %v531 = vsel %vm466, %v519, 0.0
    %v532 = vsel %vm467, %v521, 0.0
    %v533 = vsel %vm468, %v523, 0.0
    %v534 = vsel %vm469, %v525, 0.0
    %v535 = vsel %vm470, %v527, 0.0
    %v536 = vsel %vm479, %v528, 0.0
    %537 = vadd.xlane.f32.xlu0 %v536
    %v538 = vpop.xlane.xlu0 %537
    %v539 = vsel %vm479, %v529, 0.0
    %540 = vadd.xlane.f32.xlu0 %v539
    %v541 = vpop.xlane.xlu0 %540
    %v542 = vsel %vm479, %v530, 0.0
    %543 = vadd.xlane.f32.xlu0 %v542
    %v544 = vpop.xlane.xlu0 %543
    %v545 = vsel %vm479, %v531, 0.0
    %546 = vadd.xlane.f32.xlu0 %v545
    %v547 = vpop.xlane.xlu0 %546
    %v548 = vsel %vm479, %v532, 0.0
    %549 = vadd.xlane.f32.xlu0 %v548
    %v550 = vpop.xlane.xlu0 %549
    %v551 = vsel %vm479, %v533, 0.0
    %552 = vadd.xlane.f32.xlu0 %v551
    %v553 = vpop.xlane.xlu0 %552
    %v554 = vsel %vm479, %v534, 0.0
    %555 = vadd.xlane.f32.xlu0 %v554
    %v556 = vpop.xlane.xlu0 %555
    %v557 = vsel %vm479, %v535, 0.0
    %558 = vadd.xlane.f32.xlu0 %v557
    %v559 = vpop.xlane.xlu0 %558
    %v560 = vmax.f32 %v538, 1e-30
    %v561 = vmax.f32 %v541, 1e-30
    %v562 = vmax.f32 %v544, 1e-30
    %v563 = vmax.f32 %v547, 1e-30
    %v564 = vmax.f32 %v550, 1e-30
    %v565 = vmax.f32 %v553, 1e-30
    %v566 = vmax.f32 %v556, 1e-30
    %v567 = vmax.f32 %v559, 1e-30
    %v568 = vrcp.pop %v560
    %v569 = vmul.f32 %v560, %v568
    %v570 = vsub.f32 1.0, %v569
    %v571 = vmul.f32 %v568, %v570
    %v572 = vadd.f32 %v568, %v571
    %vm573 = vweird.f32 %v560
    %vm574 = vweird.f32 %v568
    %vm575 = vmor %vm573, %vm574
    %v576 = vsel %vm575, %v568, %v572
    %v577 = vand.u32 2147483647, %v560
    %vm578 = vcmp.eq.f32.partialorder %v577, 8.507059e+37
    %v579 = vand.u32 %v560, 2147483648
    %v580 = vor.u32 1.1754944e-38, %v579
    %v581 = vsel %vm578, %v580, %v576
    %v582 = vmul.f32 %v528, %v581
    %v583 = vrcp.pop %v561
    %v584 = vmul.f32 %v561, %v583
    %v585 = vsub.f32 1.0, %v584
    %v586 = vmul.f32 %v583, %v585
    %v587 = vadd.f32 %v583, %v586
    %vm588 = vweird.f32 %v561
    %vm589 = vweird.f32 %v583
    %vm590 = vmor %vm588, %vm589
    %v591 = vsel %vm590, %v583, %v587
    %v592 = vand.u32 2147483647, %v561
    %vm593 = vcmp.eq.f32.partialorder %v592, 8.507059e+37
    %v594 = vand.u32 %v561, 2147483648
    %v595 = vor.u32 1.1754944e-38, %v594
    %v596 = vsel %vm593, %v595, %v591
    %v597 = vmul.f32 %v529, %v596
    %v598 = vrcp.pop %v562
    %v599 = vmul.f32 %v562, %v598
    %v600 = vsub.f32 1.0, %v599
    %v601 = vmul.f32 %v598, %v600
    %v602 = vadd.f32 %v598, %v601
    %vm603 = vweird.f32 %v562
    %vm604 = vweird.f32 %v598
    %vm605 = vmor %vm603, %vm604
    %v606 = vsel %vm605, %v598, %v602
    %v607 = vand.u32 2147483647, %v562
    %vm608 = vcmp.eq.f32.partialorder %v607, 8.507059e+37
    %v609 = vand.u32 %v562, 2147483648
    %v610 = vor.u32 1.1754944e-38, %v609
    %v611 = vsel %vm608, %v610, %v606
    %v612 = vmul.f32 %v530, %v611
    %v613 = vrcp.pop %v563
    %v614 = vmul.f32 %v563, %v613
    %v615 = vsub.f32 1.0, %v614
    %v616 = vmul.f32 %v613, %v615
    %v617 = vadd.f32 %v613, %v616
    %vm618 = vweird.f32 %v563
    %vm619 = vweird.f32 %v613
    %vm620 = vmor %vm618, %vm619
    %v621 = vsel %vm620, %v613, %v617
    %v622 = vand.u32 2147483647, %v563
    %vm623 = vcmp.eq.f32.partialorder %v622, 8.507059e+37
    %v624 = vand.u32 %v563, 2147483648
    %v625 = vor.u32 1.1754944e-38, %v624
    %v626 = vsel %vm623, %v625, %v621
    %v627 = vmul.f32 %v531, %v626
    %v628 = vrcp.pop %v564
    %v629 = vmul.f32 %v564, %v628
    %v630 = vsub.f32 1.0, %v629
    %v631 = vmul.f32 %v628, %v630
    %v632 = vadd.f32 %v628, %v631
    %vm633 = vweird.f32 %v564
    %vm634 = vweird.f32 %v628
    %vm635 = vmor %vm633, %vm634
    %v636 = vsel %vm635, %v628, %v632
    %v637 = vand.u32 2147483647, %v564
    %vm638 = vcmp.eq.f32.partialorder %v637, 8.507059e+37
    %v639 = vand.u32 %v564, 2147483648
    %v640 = vor.u32 1.1754944e-38, %v639
    %v641 = vsel %vm638, %v640, %v636
    %v642 = vmul.f32 %v532, %v641
    %v643 = vrcp.pop %v565
    %v644 = vmul.f32 %v565, %v643
    %v645 = vsub.f32 1.0, %v644
    %v646 = vmul.f32 %v643, %v645
    %v647 = vadd.f32 %v643, %v646
    %vm648 = vweird.f32 %v565
    %vm649 = vweird.f32 %v643
    %vm650 = vmor %vm648, %vm649
    %v651 = vsel %vm650, %v643, %v647
    %v652 = vand.u32 2147483647, %v565
    %vm653 = vcmp.eq.f32.partialorder %v652, 8.507059e+37
    %v654 = vand.u32 %v565, 2147483648
    %v655 = vor.u32 1.1754944e-38, %v654
    %v656 = vsel %vm653, %v655, %v651
    %v657 = vmul.f32 %v533, %v656
    %v658 = vrcp.pop %v566
    %v659 = vmul.f32 %v566, %v658
    %v660 = vsub.f32 1.0, %v659
    %v661 = vmul.f32 %v658, %v660
    %v662 = vadd.f32 %v658, %v661
    %vm663 = vweird.f32 %v566
    %vm664 = vweird.f32 %v658
    %vm665 = vmor %vm663, %vm664
    %v666 = vsel %vm665, %v658, %v662
    %v667 = vand.u32 2147483647, %v566
    %vm668 = vcmp.eq.f32.partialorder %v667, 8.507059e+37
    %v669 = vand.u32 %v566, 2147483648
    %v670 = vor.u32 1.1754944e-38, %v669
    %v671 = vsel %vm668, %v670, %v666
    %v672 = vmul.f32 %v534, %v671
    %v673 = vrcp.pop %v567
    %v674 = vmul.f32 %v567, %v673
    %v675 = vsub.f32 1.0, %v674
    %v676 = vmul.f32 %v673, %v675
    %v677 = vadd.f32 %v673, %v676
    %vm678 = vweird.f32 %v567
    %vm679 = vweird.f32 %v673
    %vm680 = vmor %vm678, %vm679
    %v681 = vsel %vm680, %v673, %v677
    %v682 = vand.u32 2147483647, %v567
    %vm683 = vcmp.eq.f32.partialorder %v682, 8.507059e+37
    %v684 = vand.u32 %v567, 2147483648
    %v685 = vor.u32 1.1754944e-38, %v684
    %v686 = vsel %vm683, %v685, %v681
    %v687 = vmul.f32 %v535, %v686
    %688 = vrot.lane.b32.xlu0 %v215, 64
    %v689 = vpop.permute.xlu0 %688
    %690 = vrot.lane.b32.xlu0 %v218, 64
    %v691 = vpop.permute.xlu0 %690
    %692 = vrot.lane.b32.xlu0 %v221, 64
    %v693 = vpop.permute.xlu0 %692
    %694 = vrot.lane.b32.xlu0 %v224, 64
    %v695 = vpop.permute.xlu0 %694
    %696 = vrot.lane.b32.xlu0 %v227, 64
    %v697 = vpop.permute.xlu0 %696
    %698 = vrot.lane.b32.xlu0 %v230, 64
    %v699 = vpop.permute.xlu0 %698
    %700 = vrot.lane.b32.xlu0 %v233, 64
    %v701 = vpop.permute.xlu0 %700
    %702 = vrot.lane.b32.xlu0 %v236, 64
    %v703 = vpop.permute.xlu0 %702
    %v713 = vsel %vm479, %v582, 0
    %v716 = vsel %vm479, %v597, 0
    %v719 = vsel %vm479, %v612, 0
    %v722 = vsel %vm479, %v627, 0
    %v725 = vsel %vm479, %v642, 0
    %v728 = vsel %vm479, %v657, 0
    %v731 = vsel %vm479, %v672, 0
    %v734 = vsel %vm479, %v687, 0
    %736 = vmatpush.msra.mxu0 0.0
    %737 = vmatpush.msra.mxu0 0.0
    %738 = vmatpush.msra.mxu0 0.0
    %739 = vmatpush.msra.mxu0 0.0
    %740 = vmatpush.msra.mxu0 0.0
    %741 = vmatpush.msra.mxu0 0.0
    %742 = vmatpush.msra.mxu0 0.0
    %743 = vmatpush.msra.mxu0 0.0
    %744 = vmatpush.msra.mxu0 %v703
    %745 = vmatpush.msra.mxu0 %v701
    %746 = vmatpush.msra.mxu0 %v699
    %747 = vmatpush.msra.mxu0 %v697
    %748 = vmatpush.msra.mxu0 %v695
    %749 = vmatpush.msra.mxu0 %v693
    %750 = vmatpush.msra.mxu0 %v691
    %751 = vmatpush.msra.mxu0 %v689
    %752 = vmatmul.f32.gmra.mxu0 %v713
    %v753 = vpop.f32.mrf.mxu0
    %v754 = vadd.f32 0.0, %v753
    %755 = vmatmul.f32.gmra.mxu0 %v716
    %v756 = vpop.f32.mrf.mxu0
    %v757 = vadd.f32 0.0, %v756
    %758 = vmatmul.f32.gmra.mxu0 %v719
    %v759 = vpop.f32.mrf.mxu0
    %v760 = vadd.f32 0.0, %v759
    %761 = vmatmul.f32.gmra.mxu0 %v722
    %v762 = vpop.f32.mrf.mxu0
    %v763 = vadd.f32 0.0, %v762
    %764 = vmatmul.f32.gmra.mxu0 %v725
    %v765 = vpop.f32.mrf.mxu0
    %v766 = vadd.f32 0.0, %v765
    %767 = vmatmul.f32.gmra.mxu0 %v728
    %v768 = vpop.f32.mrf.mxu0
    %v769 = vadd.f32 0.0, %v768
    %770 = vmatmul.f32.gmra.mxu0 %v731
    %v771 = vpop.f32.mrf.mxu0
    %v772 = vadd.f32 0.0, %v771
    %773 = vmatmul.f32.gmra.mxu0 %v734
    %v774 = vpop.f32.mrf.mxu0
    %v775 = vadd.f32 0.0, %v774
    %776 = vdwg.mxu0
    %v777 = vadd.f32 %v754, %v760
    %v778 = vadd.f32 %v757, %v763
    %v779 = vadd.f32 %v777, %v766
    %v780 = vadd.f32 %v778, %v769
    %v781 = vadd.f32 %v779, %v772
    %v782 = vadd.f32 %v780, %v775
    %v783 = vadd.f32 %v781, %v353
    %v784 = vadd.f32 %v782, %v356
    %s785 = scalar_lea.vmem %s2, 64
    %v786 = vld [vmem:[%s785] sm:$0xff]
    %v787 = vld [vmem:[%s785 + $0x8] sm:$0xff]
    %v788 = vld [vmem:[%s785 + $0x10] sm:$0xff]
    %v789 = vld [vmem:[%s785 + $0x18] sm:$0xff]
    %v790 = vld [vmem:[%s785 + $0x20] sm:$0xff]
    %v791 = vld [vmem:[%s785 + $0x28] sm:$0xff]
    %v792 = vld [vmem:[%s785 + $0x30] sm:$0xff]
    %v793 = vld [vmem:[%s785 + $0x38] sm:$0xff]
    %794 = vrot.lane.b32.xlu0 %v215, 32
    %v795 = vpop.permute.xlu0 %794
    %796 = vrot.lane.b32.xlu0 %v218, 32
    %v797 = vpop.permute.xlu0 %796
    %798 = vrot.lane.b32.xlu0 %v221, 32
    %v799 = vpop.permute.xlu0 %798
    %800 = vrot.lane.b32.xlu0 %v224, 32
    %v801 = vpop.permute.xlu0 %800
    %802 = vrot.lane.b32.xlu0 %v227, 32
    %v803 = vpop.permute.xlu0 %802
    %804 = vrot.lane.b32.xlu0 %v230, 32
    %v805 = vpop.permute.xlu0 %804
    %806 = vrot.lane.b32.xlu0 %v233, 32
    %v807 = vpop.permute.xlu0 %806
    %808 = vrot.lane.b32.xlu0 %v236, 32
    %v809 = vpop.permute.xlu0 %808
    %v810 = vsel %vm328, %v795, 0
    %v812 = vsel %vm328, %v797, 0
    %v814 = vsel %vm328, %v799, 0
    %v816 = vsel %vm328, %v801, 0
    %v818 = vsel %vm328, %v803, 0
    %v820 = vsel %vm328, %v805, 0
    %v822 = vsel %vm328, %v807, 0
    %v824 = vsel %vm328, %v809, 0
    %v827 = vsel %vm328, %v256, 0
    %v830 = vsel %vm328, %v259, 0
    %v833 = vsel %vm328, %v262, 0
    %v836 = vsel %vm328, %v265, 0
    %v839 = vsel %vm328, %v268, 0
    %v842 = vsel %vm328, %v271, 0
    %v845 = vsel %vm328, %v274, 0
    %v848 = vsel %vm328, %v277, 0
    %850 = vmatpush.xpose.msra.mxu0 0.0
    %851 = vmatpush.xpose.msra.mxu0 0.0
    %852 = vmatpush.xpose.msra.mxu0 0.0
    %853 = vmatpush.xpose.msra.mxu0 0.0
    %854 = vmatpush.xpose.msra.mxu0 0.0
    %855 = vmatpush.xpose.msra.mxu0 0.0
    %856 = vmatpush.xpose.msra.mxu0 0.0
    %857 = vmatpush.xpose.msra.mxu0 0.0
    %858 = vmatpush.xpose.msra.mxu0 %v848
    %859 = vmatpush.xpose.msra.mxu0 %v845
    %860 = vmatpush.xpose.msra.mxu0 %v842
    %861 = vmatpush.xpose.msra.mxu0 %v839
    %862 = vmatpush.xpose.msra.mxu0 %v836
    %863 = vmatpush.xpose.msra.mxu0 %v833
    %864 = vmatpush.xpose.msra.mxu0 %v830
    %865 = vmatpush.xpose.msra.mxu0 %v827
    %866 = vmatmul.f32.gmra.mxu0 %v810
    %v867 = vpop.f32.mrf.mxu0
    %v868 = vadd.f32 0.0, %v867
    %869 = vmatmul.f32.gmra.mxu0 %v812
    %v870 = vpop.f32.mrf.mxu0
    %v871 = vadd.f32 0.0, %v870
    %872 = vmatmul.f32.gmra.mxu0 %v814
    %v873 = vpop.f32.mrf.mxu0
    %v874 = vadd.f32 0.0, %v873
    %875 = vmatmul.f32.gmra.mxu0 %v816
    %v876 = vpop.f32.mrf.mxu0
    %v877 = vadd.f32 0.0, %v876
    %878 = vmatmul.f32.gmra.mxu0 %v818
    %v879 = vpop.f32.mrf.mxu0
    %v880 = vadd.f32 0.0, %v879
    %881 = vmatmul.f32.gmra.mxu0 %v820
    %v882 = vpop.f32.mrf.mxu0
    %v883 = vadd.f32 0.0, %v882
    %884 = vmatmul.f32.gmra.mxu0 %v822
    %v885 = vpop.f32.mrf.mxu0
    %v886 = vadd.f32 0.0, %v885
    %887 = vmatmul.f32.gmra.mxu0 %v824
    %v888 = vpop.f32.mrf.mxu0
    %v889 = vadd.f32 0.0, %v888
    %890 = vdwg.mxu0
    %vm891 = vcmp.gt.f32.partialorder %v786, 0.0
    %vm892 = vcmp.gt.f32.partialorder %v787, 0.0
    %vm893 = vcmp.gt.f32.partialorder %v788, 0.0
    %vm894 = vcmp.gt.f32.partialorder %v789, 0.0
    %vm895 = vcmp.gt.f32.partialorder %v790, 0.0
    %vm896 = vcmp.gt.f32.partialorder %v791, 0.0
    %vm897 = vcmp.gt.f32.partialorder %v792, 0.0
    %vm898 = vcmp.gt.f32.partialorder %v793, 0.0
    %v899 = vsel %vm891, %v868, -1e+30
    %v900 = vsel %vm892, %v871, -1e+30
    %v901 = vsel %vm893, %v874, -1e+30
    %v902 = vsel %vm894, %v877, -1e+30
    %v903 = vsel %vm895, %v880, -1e+30
    %v904 = vsel %vm896, %v883, -1e+30
    %v905 = vsel %vm897, %v886, -1e+30
    %v906 = vsel %vm898, %v889, -1e+30
    %v907 = vsel %vm479, %v899, -inf
    %908 = vmax.xlane.f32.xlu0 %v907
    %v909 = vpop.xlane.xlu0 %908
    %v910 = vsel %vm479, %v900, -inf
    %911 = vmax.xlane.f32.xlu0 %v910
    %v912 = vpop.xlane.xlu0 %911
    %v913 = vsel %vm479, %v901, -inf
    %914 = vmax.xlane.f32.xlu0 %v913
    %v915 = vpop.xlane.xlu0 %914
    %v916 = vsel %vm479, %v902, -inf
    %917 = vmax.xlane.f32.xlu0 %v916
    %v918 = vpop.xlane.xlu0 %917
    %v919 = vsel %vm479, %v903, -inf
    %920 = vmax.xlane.f32.xlu0 %v919
    %v921 = vpop.xlane.xlu0 %920
    %v922 = vsel %vm479, %v904, -inf
    %923 = vmax.xlane.f32.xlu0 %v922
    %v924 = vpop.xlane.xlu0 %923
    %v925 = vsel %vm479, %v905, -inf
    %926 = vmax.xlane.f32.xlu0 %v925
    %v927 = vpop.xlane.xlu0 %926
    %v928 = vsel %vm479, %v906, -inf
    %929 = vmax.xlane.f32.xlu0 %v928
    %v930 = vpop.xlane.xlu0 %929
    %v931 = vsub.f32 %v899, %v909
    %v932 = vsub.f32 %v900, %v912
    %v933 = vsub.f32 %v901, %v915
    %v934 = vsub.f32 %v902, %v918
    %v935 = vsub.f32 %v903, %v921
    %v936 = vsub.f32 %v904, %v924
    %v937 = vsub.f32 %v905, %v927
    %v938 = vsub.f32 %v906, %v930
    %v939 = vmul.f32 %v931, 1.442695
    %v940 = vpow.pop %v939
    %v941 = vmul.f32 %v932, 1.442695
    %v942 = vpow.pop %v941
    %v943 = vmul.f32 %v933, 1.442695
    %v944 = vpow.pop %v943
    %v945 = vmul.f32 %v934, 1.442695
    %v946 = vpow.pop %v945
    %v947 = vmul.f32 %v935, 1.442695
    %v948 = vpow.pop %v947
    %v949 = vmul.f32 %v936, 1.442695
    %v950 = vpow.pop %v949
    %v951 = vmul.f32 %v937, 1.442695
    %v952 = vpow.pop %v951
    %v953 = vmul.f32 %v938, 1.442695
    %v954 = vpow.pop %v953
    %v955 = vsel %vm891, %v940, 0.0
    %v956 = vsel %vm892, %v942, 0.0
    %v957 = vsel %vm893, %v944, 0.0
    %v958 = vsel %vm894, %v946, 0.0
    %v959 = vsel %vm895, %v948, 0.0
    %v960 = vsel %vm896, %v950, 0.0
    %v961 = vsel %vm897, %v952, 0.0
    %v962 = vsel %vm898, %v954, 0.0
    %v963 = vsel %vm479, %v955, 0.0
    %964 = vadd.xlane.f32.xlu0 %v963
    %v965 = vpop.xlane.xlu0 %964
    %v966 = vsel %vm479, %v956, 0.0
    %967 = vadd.xlane.f32.xlu0 %v966
    %v968 = vpop.xlane.xlu0 %967
    %v969 = vsel %vm479, %v957, 0.0
    %970 = vadd.xlane.f32.xlu0 %v969
    %v971 = vpop.xlane.xlu0 %970
    %v972 = vsel %vm479, %v958, 0.0
    %973 = vadd.xlane.f32.xlu0 %v972
    %v974 = vpop.xlane.xlu0 %973
    %v975 = vsel %vm479, %v959, 0.0
    %976 = vadd.xlane.f32.xlu0 %v975
    %v977 = vpop.xlane.xlu0 %976
    %v978 = vsel %vm479, %v960, 0.0
    %979 = vadd.xlane.f32.xlu0 %v978
    %v980 = vpop.xlane.xlu0 %979
    %v981 = vsel %vm479, %v961, 0.0
    %982 = vadd.xlane.f32.xlu0 %v981
    %v983 = vpop.xlane.xlu0 %982
    %v984 = vsel %vm479, %v962, 0.0
    %985 = vadd.xlane.f32.xlu0 %v984
    %v986 = vpop.xlane.xlu0 %985
    %v987 = vmax.f32 %v965, 1e-30
    %v988 = vmax.f32 %v968, 1e-30
    %v989 = vmax.f32 %v971, 1e-30
    %v990 = vmax.f32 %v974, 1e-30
    %v991 = vmax.f32 %v977, 1e-30
    %v992 = vmax.f32 %v980, 1e-30
    %v993 = vmax.f32 %v983, 1e-30
    %v994 = vmax.f32 %v986, 1e-30
    %v995 = vrcp.pop %v987
    %v996 = vmul.f32 %v987, %v995
    %v997 = vsub.f32 1.0, %v996
    %v998 = vmul.f32 %v995, %v997
    %v999 = vadd.f32 %v995, %v998
    %vm1000 = vweird.f32 %v987
    %vm1001 = vweird.f32 %v995
    %vm1002 = vmor %vm1000, %vm1001
    %v1003 = vsel %vm1002, %v995, %v999
    %v1004 = vand.u32 2147483647, %v987
    %vm1005 = vcmp.eq.f32.partialorder %v1004, 8.507059e+37
    %v1006 = vand.u32 %v987, 2147483648
    %v1007 = vor.u32 1.1754944e-38, %v1006
    %v1008 = vsel %vm1005, %v1007, %v1003
    %v1009 = vmul.f32 %v955, %v1008
    %v1010 = vrcp.pop %v988
    %v1011 = vmul.f32 %v988, %v1010
    %v1012 = vsub.f32 1.0, %v1011
    %v1013 = vmul.f32 %v1010, %v1012
    %v1014 = vadd.f32 %v1010, %v1013
    %vm1015 = vweird.f32 %v988
    %vm1016 = vweird.f32 %v1010
    %vm1017 = vmor %vm1015, %vm1016
    %v1018 = vsel %vm1017, %v1010, %v1014
    %v1019 = vand.u32 2147483647, %v988
    %vm1020 = vcmp.eq.f32.partialorder %v1019, 8.507059e+37
    %v1021 = vand.u32 %v988, 2147483648
    %v1022 = vor.u32 1.1754944e-38, %v1021
    %v1023 = vsel %vm1020, %v1022, %v1018
    %v1024 = vmul.f32 %v956, %v1023
    %v1025 = vrcp.pop %v989
    %v1026 = vmul.f32 %v989, %v1025
    %v1027 = vsub.f32 1.0, %v1026
    %v1028 = vmul.f32 %v1025, %v1027
    %v1029 = vadd.f32 %v1025, %v1028
    %vm1030 = vweird.f32 %v989
    %vm1031 = vweird.f32 %v1025
    %vm1032 = vmor %vm1030, %vm1031
    %v1033 = vsel %vm1032, %v1025, %v1029
    %v1034 = vand.u32 2147483647, %v989
    %vm1035 = vcmp.eq.f32.partialorder %v1034, 8.507059e+37
    %v1036 = vand.u32 %v989, 2147483648
    %v1037 = vor.u32 1.1754944e-38, %v1036
    %v1038 = vsel %vm1035, %v1037, %v1033
    %v1039 = vmul.f32 %v957, %v1038
    %v1040 = vrcp.pop %v990
    %v1041 = vmul.f32 %v990, %v1040
    %v1042 = vsub.f32 1.0, %v1041
    %v1043 = vmul.f32 %v1040, %v1042
    %v1044 = vadd.f32 %v1040, %v1043
    %vm1045 = vweird.f32 %v990
    %vm1046 = vweird.f32 %v1040
    %vm1047 = vmor %vm1045, %vm1046
    %v1048 = vsel %vm1047, %v1040, %v1044
    %v1049 = vand.u32 2147483647, %v990
    %vm1050 = vcmp.eq.f32.partialorder %v1049, 8.507059e+37
    %v1051 = vand.u32 %v990, 2147483648
    %v1052 = vor.u32 1.1754944e-38, %v1051
    %v1053 = vsel %vm1050, %v1052, %v1048
    %v1054 = vmul.f32 %v958, %v1053
    %v1055 = vrcp.pop %v991
    %v1056 = vmul.f32 %v991, %v1055
    %v1057 = vsub.f32 1.0, %v1056
    %v1058 = vmul.f32 %v1055, %v1057
    %v1059 = vadd.f32 %v1055, %v1058
    %vm1060 = vweird.f32 %v991
    %vm1061 = vweird.f32 %v1055
    %vm1062 = vmor %vm1060, %vm1061
    %v1063 = vsel %vm1062, %v1055, %v1059
    %v1064 = vand.u32 2147483647, %v991
    %vm1065 = vcmp.eq.f32.partialorder %v1064, 8.507059e+37
    %v1066 = vand.u32 %v991, 2147483648
    %v1067 = vor.u32 1.1754944e-38, %v1066
    %v1068 = vsel %vm1065, %v1067, %v1063
    %v1069 = vmul.f32 %v959, %v1068
    %v1070 = vrcp.pop %v992
    %v1071 = vmul.f32 %v992, %v1070
    %v1072 = vsub.f32 1.0, %v1071
    %v1073 = vmul.f32 %v1070, %v1072
    %v1074 = vadd.f32 %v1070, %v1073
    %vm1075 = vweird.f32 %v992
    %vm1076 = vweird.f32 %v1070
    %vm1077 = vmor %vm1075, %vm1076
    %v1078 = vsel %vm1077, %v1070, %v1074
    %v1079 = vand.u32 2147483647, %v992
    %vm1080 = vcmp.eq.f32.partialorder %v1079, 8.507059e+37
    %v1081 = vand.u32 %v992, 2147483648
    %v1082 = vor.u32 1.1754944e-38, %v1081
    %v1083 = vsel %vm1080, %v1082, %v1078
    %v1084 = vmul.f32 %v960, %v1083
    %v1085 = vrcp.pop %v993
    %v1086 = vmul.f32 %v993, %v1085
    %v1087 = vsub.f32 1.0, %v1086
    %v1088 = vmul.f32 %v1085, %v1087
    %v1089 = vadd.f32 %v1085, %v1088
    %vm1090 = vweird.f32 %v993
    %vm1091 = vweird.f32 %v1085
    %vm1092 = vmor %vm1090, %vm1091
    %v1093 = vsel %vm1092, %v1085, %v1089
    %v1094 = vand.u32 2147483647, %v993
    %vm1095 = vcmp.eq.f32.partialorder %v1094, 8.507059e+37
    %v1096 = vand.u32 %v993, 2147483648
    %v1097 = vor.u32 1.1754944e-38, %v1096
    %v1098 = vsel %vm1095, %v1097, %v1093
    %v1099 = vmul.f32 %v961, %v1098
    %v1100 = vrcp.pop %v994
    %v1101 = vmul.f32 %v994, %v1100
    %v1102 = vsub.f32 1.0, %v1101
    %v1103 = vmul.f32 %v1100, %v1102
    %v1104 = vadd.f32 %v1100, %v1103
    %vm1105 = vweird.f32 %v994
    %vm1106 = vweird.f32 %v1100
    %vm1107 = vmor %vm1105, %vm1106
    %v1108 = vsel %vm1107, %v1100, %v1104
    %v1109 = vand.u32 2147483647, %v994
    %vm1110 = vcmp.eq.f32.partialorder %v1109, 8.507059e+37
    %v1111 = vand.u32 %v994, 2147483648
    %v1112 = vor.u32 1.1754944e-38, %v1111
    %v1113 = vsel %vm1110, %v1112, %v1108
    %v1114 = vmul.f32 %v962, %v1113
    %1115 = vrot.lane.b32.xlu0 %v256, 96
    %v1116 = vpop.permute.xlu0 %1115
    %1117 = vrot.lane.b32.xlu0 %v259, 96
    %v1118 = vpop.permute.xlu0 %1117
    %1119 = vrot.lane.b32.xlu0 %v262, 96
    %v1120 = vpop.permute.xlu0 %1119
    %1121 = vrot.lane.b32.xlu0 %v265, 96
    %v1122 = vpop.permute.xlu0 %1121
    %1123 = vrot.lane.b32.xlu0 %v268, 96
    %v1124 = vpop.permute.xlu0 %1123
    %1125 = vrot.lane.b32.xlu0 %v271, 96
    %v1126 = vpop.permute.xlu0 %1125
    %1127 = vrot.lane.b32.xlu0 %v274, 96
    %v1128 = vpop.permute.xlu0 %1127
    %1129 = vrot.lane.b32.xlu0 %v277, 96
    %v1130 = vpop.permute.xlu0 %1129
    %v1140 = vsel %vm479, %v1009, 0
    %v1143 = vsel %vm479, %v1024, 0
    %v1146 = vsel %vm479, %v1039, 0
    %v1149 = vsel %vm479, %v1054, 0
    %v1152 = vsel %vm479, %v1069, 0
    %v1155 = vsel %vm479, %v1084, 0
    %v1158 = vsel %vm479, %v1099, 0
    %v1161 = vsel %vm479, %v1114, 0
    %1163 = vmatpush.msra.mxu0 0.0
    %1164 = vmatpush.msra.mxu0 0.0
    %1165 = vmatpush.msra.mxu0 0.0
    %1166 = vmatpush.msra.mxu0 0.0
    %1167 = vmatpush.msra.mxu0 0.0
    %1168 = vmatpush.msra.mxu0 0.0
    %1169 = vmatpush.msra.mxu0 0.0
    %1170 = vmatpush.msra.mxu0 0.0
    %1171 = vmatpush.msra.mxu0 %v1130
    %1172 = vmatpush.msra.mxu0 %v1128
    %1173 = vmatpush.msra.mxu0 %v1126
    %1174 = vmatpush.msra.mxu0 %v1124
    %1175 = vmatpush.msra.mxu0 %v1122
    %1176 = vmatpush.msra.mxu0 %v1120
    %1177 = vmatpush.msra.mxu0 %v1118
    %1178 = vmatpush.msra.mxu0 %v1116
    %1179 = vmatmul.f32.gmra.mxu0 %v1140
    %v1180 = vpop.f32.mrf.mxu0
    %v1181 = vadd.f32 0.0, %v1180
    %1182 = vmatmul.f32.gmra.mxu0 %v1143
    %v1183 = vpop.f32.mrf.mxu0
    %v1184 = vadd.f32 0.0, %v1183
    %1185 = vmatmul.f32.gmra.mxu0 %v1146
    %v1186 = vpop.f32.mrf.mxu0
    %v1187 = vadd.f32 0.0, %v1186
    %1188 = vmatmul.f32.gmra.mxu0 %v1149
    %v1189 = vpop.f32.mrf.mxu0
    %v1190 = vadd.f32 0.0, %v1189
    %1191 = vmatmul.f32.gmra.mxu0 %v1152
    %v1192 = vpop.f32.mrf.mxu0
    %v1193 = vadd.f32 0.0, %v1192
    %1194 = vmatmul.f32.gmra.mxu0 %v1155
    %v1195 = vpop.f32.mrf.mxu0
    %v1196 = vadd.f32 0.0, %v1195
    %1197 = vmatmul.f32.gmra.mxu0 %v1158
    %v1198 = vpop.f32.mrf.mxu0
    %v1199 = vadd.f32 0.0, %v1198
    %1200 = vmatmul.f32.gmra.mxu0 %v1161
    %v1201 = vpop.f32.mrf.mxu0
    %v1202 = vadd.f32 0.0, %v1201
    %1203 = vdwg.mxu0
    %v1204 = vadd.f32 %v1181, %v1187
    %v1205 = vadd.f32 %v1184, %v1190
    %v1206 = vadd.f32 %v1204, %v1193
    %v1207 = vadd.f32 %v1205, %v1196
    %v1208 = vadd.f32 %v1206, %v1199
    %v1209 = vadd.f32 %v1207, %v1202
    %1212 = vrot.lane.b32.xlu0 %v353, 96
    %v1213 = vpop.permute.xlu0 %1212
    %1214 = vrot.lane.b32.xlu0 %v356, 96
    %v1215 = vpop.permute.xlu0 %1214
    %v1218 = vadd.f32 %v1208, %v1213
    %v1219 = vadd.f32 %v1209, %v1215
    %s1220 = scalar_lea.vmem %s2, 128
    %v1221 = vld [vmem:[%s1220] sm:$0xff]
    %v1222 = vld [vmem:[%s1220 + $0x8] sm:$0xff]
    %v1223 = vld [vmem:[%s1220 + $0x10] sm:$0xff]
    %v1224 = vld [vmem:[%s1220 + $0x18] sm:$0xff]
    %v1225 = vld [vmem:[%s1220 + $0x20] sm:$0xff]
    %v1226 = vld [vmem:[%s1220 + $0x28] sm:$0xff]
    %v1227 = vld [vmem:[%s1220 + $0x30] sm:$0xff]
    %v1228 = vld [vmem:[%s1220 + $0x38] sm:$0xff]
    %1229 = vrot.lane.b32.xlu0 %v256, 64
    %v1230 = vpop.permute.xlu0 %1229
    %1231 = vrot.lane.b32.xlu0 %v259, 64
    %v1232 = vpop.permute.xlu0 %1231
    %1233 = vrot.lane.b32.xlu0 %v262, 64
    %v1234 = vpop.permute.xlu0 %1233
    %1235 = vrot.lane.b32.xlu0 %v265, 64
    %v1236 = vpop.permute.xlu0 %1235
    %1237 = vrot.lane.b32.xlu0 %v268, 64
    %v1238 = vpop.permute.xlu0 %1237
    %1239 = vrot.lane.b32.xlu0 %v271, 64
    %v1240 = vpop.permute.xlu0 %1239
    %1241 = vrot.lane.b32.xlu0 %v274, 64
    %v1242 = vpop.permute.xlu0 %1241
    %1243 = vrot.lane.b32.xlu0 %v277, 64
    %v1244 = vpop.permute.xlu0 %1243
    %1245 = vrot.lane.b32.xlu0 %v256, 32
    %v1246 = vpop.permute.xlu0 %1245
    %1247 = vrot.lane.b32.xlu0 %v259, 32
    %v1248 = vpop.permute.xlu0 %1247
    %1249 = vrot.lane.b32.xlu0 %v262, 32
    %v1250 = vpop.permute.xlu0 %1249
    %1251 = vrot.lane.b32.xlu0 %v265, 32
    %v1252 = vpop.permute.xlu0 %1251
    %1253 = vrot.lane.b32.xlu0 %v268, 32
    %v1254 = vpop.permute.xlu0 %1253
    %1255 = vrot.lane.b32.xlu0 %v271, 32
    %v1256 = vpop.permute.xlu0 %1255
    %1257 = vrot.lane.b32.xlu0 %v274, 32
    %v1258 = vpop.permute.xlu0 %1257
    %1259 = vrot.lane.b32.xlu0 %v277, 32
    %v1260 = vpop.permute.xlu0 %1259
    %v1261 = vsel %vm328, %v1230, 0
    %v1263 = vsel %vm328, %v1232, 0
    %v1265 = vsel %vm328, %v1234, 0
    %v1267 = vsel %vm328, %v1236, 0
    %v1269 = vsel %vm328, %v1238, 0
    %v1271 = vsel %vm328, %v1240, 0
    %v1273 = vsel %vm328, %v1242, 0
    %v1275 = vsel %vm328, %v1244, 0
    %v1277 = vsel %vm328, %v1246, 0
    %v1279 = vsel %vm328, %v1248, 0
    %v1281 = vsel %vm328, %v1250, 0
    %v1283 = vsel %vm328, %v1252, 0
    %v1285 = vsel %vm328, %v1254, 0
    %v1287 = vsel %vm328, %v1256, 0
    %v1289 = vsel %vm328, %v1258, 0
    %v1291 = vsel %vm328, %v1260, 0
    %1293 = vmatpush.xpose.msra.mxu0 0.0
    %1294 = vmatpush.xpose.msra.mxu0 0.0
    %1295 = vmatpush.xpose.msra.mxu0 0.0
    %1296 = vmatpush.xpose.msra.mxu0 0.0
    %1297 = vmatpush.xpose.msra.mxu0 0.0
    %1298 = vmatpush.xpose.msra.mxu0 0.0
    %1299 = vmatpush.xpose.msra.mxu0 0.0
    %1300 = vmatpush.xpose.msra.mxu0 0.0
    %1301 = vmatpush.xpose.msra.mxu0 %v1291
    %1302 = vmatpush.xpose.msra.mxu0 %v1289
    %1303 = vmatpush.xpose.msra.mxu0 %v1287
    %1304 = vmatpush.xpose.msra.mxu0 %v1285
    %1305 = vmatpush.xpose.msra.mxu0 %v1283
    %1306 = vmatpush.xpose.msra.mxu0 %v1281
    %1307 = vmatpush.xpose.msra.mxu0 %v1279
    %1308 = vmatpush.xpose.msra.mxu0 %v1277
    %1309 = vmatmul.f32.gmra.mxu0 %v1261
    %v1310 = vpop.f32.mrf.mxu0
    %v1311 = vadd.f32 0.0, %v1310
    %1312 = vmatmul.f32.gmra.mxu0 %v1263
    %v1313 = vpop.f32.mrf.mxu0
    %v1314 = vadd.f32 0.0, %v1313
    %1315 = vmatmul.f32.gmra.mxu0 %v1265
    %v1316 = vpop.f32.mrf.mxu0
    %v1317 = vadd.f32 0.0, %v1316
    %1318 = vmatmul.f32.gmra.mxu0 %v1267
    %v1319 = vpop.f32.mrf.mxu0
    %v1320 = vadd.f32 0.0, %v1319
    %1321 = vmatmul.f32.gmra.mxu0 %v1269
    %v1322 = vpop.f32.mrf.mxu0
    %v1323 = vadd.f32 0.0, %v1322
    %1324 = vmatmul.f32.gmra.mxu0 %v1271
    %v1325 = vpop.f32.mrf.mxu0
    %v1326 = vadd.f32 0.0, %v1325
    %1327 = vmatmul.f32.gmra.mxu0 %v1273
    %v1328 = vpop.f32.mrf.mxu0
    %v1329 = vadd.f32 0.0, %v1328
    %1330 = vmatmul.f32.gmra.mxu0 %v1275
    %v1331 = vpop.f32.mrf.mxu0
    %v1332 = vadd.f32 0.0, %v1331
    %1333 = vdwg.mxu0
    %vm1334 = vcmp.gt.f32.partialorder %v1221, 0.0
    %vm1335 = vcmp.gt.f32.partialorder %v1222, 0.0
    %vm1336 = vcmp.gt.f32.partialorder %v1223, 0.0
    %vm1337 = vcmp.gt.f32.partialorder %v1224, 0.0
    %vm1338 = vcmp.gt.f32.partialorder %v1225, 0.0
    %vm1339 = vcmp.gt.f32.partialorder %v1226, 0.0
    %vm1340 = vcmp.gt.f32.partialorder %v1227, 0.0
    %vm1341 = vcmp.gt.f32.partialorder %v1228, 0.0
    %v1342 = vsel %vm1334, %v1311, -1e+30
    %v1343 = vsel %vm1335, %v1314, -1e+30
    %v1344 = vsel %vm1336, %v1317, -1e+30
    %v1345 = vsel %vm1337, %v1320, -1e+30
    %v1346 = vsel %vm1338, %v1323, -1e+30
    %v1347 = vsel %vm1339, %v1326, -1e+30
    %v1348 = vsel %vm1340, %v1329, -1e+30
    %v1349 = vsel %vm1341, %v1332, -1e+30
    %v1350 = vsel %vm479, %v1342, -inf
    %1351 = vmax.xlane.f32.xlu0 %v1350
    %v1352 = vpop.xlane.xlu0 %1351
    %v1353 = vsel %vm479, %v1343, -inf
    %1354 = vmax.xlane.f32.xlu0 %v1353
    %v1355 = vpop.xlane.xlu0 %1354
    %v1356 = vsel %vm479, %v1344, -inf
    %1357 = vmax.xlane.f32.xlu0 %v1356
    %v1358 = vpop.xlane.xlu0 %1357
    %v1359 = vsel %vm479, %v1345, -inf
    %1360 = vmax.xlane.f32.xlu0 %v1359
    %v1361 = vpop.xlane.xlu0 %1360
    %v1362 = vsel %vm479, %v1346, -inf
    %1363 = vmax.xlane.f32.xlu0 %v1362
    %v1364 = vpop.xlane.xlu0 %1363
    %v1365 = vsel %vm479, %v1347, -inf
    %1366 = vmax.xlane.f32.xlu0 %v1365
    %v1367 = vpop.xlane.xlu0 %1366
    %v1368 = vsel %vm479, %v1348, -inf
    %1369 = vmax.xlane.f32.xlu0 %v1368
    %v1370 = vpop.xlane.xlu0 %1369
    %v1371 = vsel %vm479, %v1349, -inf
    %1372 = vmax.xlane.f32.xlu0 %v1371
    %v1373 = vpop.xlane.xlu0 %1372
    %v1374 = vsub.f32 %v1342, %v1352
    %v1375 = vsub.f32 %v1343, %v1355
    %v1376 = vsub.f32 %v1344, %v1358
    %v1377 = vsub.f32 %v1345, %v1361
    %v1378 = vsub.f32 %v1346, %v1364
    %v1379 = vsub.f32 %v1347, %v1367
    %v1380 = vsub.f32 %v1348, %v1370
    %v1381 = vsub.f32 %v1349, %v1373
    %v1382 = vmul.f32 %v1374, 1.442695
    %v1383 = vpow.pop %v1382
    %v1384 = vmul.f32 %v1375, 1.442695
    %v1385 = vpow.pop %v1384
    %v1386 = vmul.f32 %v1376, 1.442695
    %v1387 = vpow.pop %v1386
    %v1388 = vmul.f32 %v1377, 1.442695
    %v1389 = vpow.pop %v1388
    %v1390 = vmul.f32 %v1378, 1.442695
    %v1391 = vpow.pop %v1390
    %v1392 = vmul.f32 %v1379, 1.442695
    %v1393 = vpow.pop %v1392
    %v1394 = vmul.f32 %v1380, 1.442695
    %v1395 = vpow.pop %v1394
    %v1396 = vmul.f32 %v1381, 1.442695
    %v1397 = vpow.pop %v1396
    %v1398 = vsel %vm1334, %v1383, 0.0
    %v1399 = vsel %vm1335, %v1385, 0.0
    %v1400 = vsel %vm1336, %v1387, 0.0
    %v1401 = vsel %vm1337, %v1389, 0.0
    %v1402 = vsel %vm1338, %v1391, 0.0
    %v1403 = vsel %vm1339, %v1393, 0.0
    %v1404 = vsel %vm1340, %v1395, 0.0
    %v1405 = vsel %vm1341, %v1397, 0.0
    %v1406 = vsel %vm479, %v1398, 0.0
    %1407 = vadd.xlane.f32.xlu0 %v1406
    %v1408 = vpop.xlane.xlu0 %1407
    %v1409 = vsel %vm479, %v1399, 0.0
    %1410 = vadd.xlane.f32.xlu0 %v1409
    %v1411 = vpop.xlane.xlu0 %1410
    %v1412 = vsel %vm479, %v1400, 0.0
    %1413 = vadd.xlane.f32.xlu0 %v1412
    %v1414 = vpop.xlane.xlu0 %1413
    %v1415 = vsel %vm479, %v1401, 0.0
    %1416 = vadd.xlane.f32.xlu0 %v1415
    %v1417 = vpop.xlane.xlu0 %1416
    %v1418 = vsel %vm479, %v1402, 0.0
    %1419 = vadd.xlane.f32.xlu0 %v1418
    %v1420 = vpop.xlane.xlu0 %1419
    %v1421 = vsel %vm479, %v1403, 0.0
    %1422 = vadd.xlane.f32.xlu0 %v1421
    %v1423 = vpop.xlane.xlu0 %1422
    %v1424 = vsel %vm479, %v1404, 0.0
    %1425 = vadd.xlane.f32.xlu0 %v1424
    %v1426 = vpop.xlane.xlu0 %1425
    %v1427 = vsel %vm479, %v1405, 0.0
    %1428 = vadd.xlane.f32.xlu0 %v1427
    %v1429 = vpop.xlane.xlu0 %1428
    %v1430 = vmax.f32 %v1408, 1e-30
    %v1431 = vmax.f32 %v1411, 1e-30
    %v1432 = vmax.f32 %v1414, 1e-30
    %v1433 = vmax.f32 %v1417, 1e-30
    %v1434 = vmax.f32 %v1420, 1e-30
    %v1435 = vmax.f32 %v1423, 1e-30
    %v1436 = vmax.f32 %v1426, 1e-30
    %v1437 = vmax.f32 %v1429, 1e-30
    %v1438 = vrcp.pop %v1430
    %v1439 = vmul.f32 %v1430, %v1438
    %v1440 = vsub.f32 1.0, %v1439
    %v1441 = vmul.f32 %v1438, %v1440
    %v1442 = vadd.f32 %v1438, %v1441
    %vm1443 = vweird.f32 %v1430
    %vm1444 = vweird.f32 %v1438
    %vm1445 = vmor %vm1443, %vm1444
    %v1446 = vsel %vm1445, %v1438, %v1442
    %v1447 = vand.u32 2147483647, %v1430
    %vm1448 = vcmp.eq.f32.partialorder %v1447, 8.507059e+37
    %v1449 = vand.u32 %v1430, 2147483648
    %v1450 = vor.u32 1.1754944e-38, %v1449
    %v1451 = vsel %vm1448, %v1450, %v1446
    %v1452 = vmul.f32 %v1398, %v1451
    %v1453 = vrcp.pop %v1431
    %v1454 = vmul.f32 %v1431, %v1453
    %v1455 = vsub.f32 1.0, %v1454
    %v1456 = vmul.f32 %v1453, %v1455
    %v1457 = vadd.f32 %v1453, %v1456
    %vm1458 = vweird.f32 %v1431
    %vm1459 = vweird.f32 %v1453
    %vm1460 = vmor %vm1458, %vm1459
    %v1461 = vsel %vm1460, %v1453, %v1457
    %v1462 = vand.u32 2147483647, %v1431
    %vm1463 = vcmp.eq.f32.partialorder %v1462, 8.507059e+37
    %v1464 = vand.u32 %v1431, 2147483648
    %v1465 = vor.u32 1.1754944e-38, %v1464
    %v1466 = vsel %vm1463, %v1465, %v1461
    %v1467 = vmul.f32 %v1399, %v1466
    %v1468 = vrcp.pop %v1432
    %v1469 = vmul.f32 %v1432, %v1468
    %v1470 = vsub.f32 1.0, %v1469
    %v1471 = vmul.f32 %v1468, %v1470
    %v1472 = vadd.f32 %v1468, %v1471
    %vm1473 = vweird.f32 %v1432
    %vm1474 = vweird.f32 %v1468
    %vm1475 = vmor %vm1473, %vm1474
    %v1476 = vsel %vm1475, %v1468, %v1472
    %v1477 = vand.u32 2147483647, %v1432
    %vm1478 = vcmp.eq.f32.partialorder %v1477, 8.507059e+37
    %v1479 = vand.u32 %v1432, 2147483648
    %v1480 = vor.u32 1.1754944e-38, %v1479
    %v1481 = vsel %vm1478, %v1480, %v1476
    %v1482 = vmul.f32 %v1400, %v1481
    %v1483 = vrcp.pop %v1433
    %v1484 = vmul.f32 %v1433, %v1483
    %v1485 = vsub.f32 1.0, %v1484
    %v1486 = vmul.f32 %v1483, %v1485
    %v1487 = vadd.f32 %v1483, %v1486
    %vm1488 = vweird.f32 %v1433
    %vm1489 = vweird.f32 %v1483
    %vm1490 = vmor %vm1488, %vm1489
    %v1491 = vsel %vm1490, %v1483, %v1487
    %v1492 = vand.u32 2147483647, %v1433
    %vm1493 = vcmp.eq.f32.partialorder %v1492, 8.507059e+37
    %v1494 = vand.u32 %v1433, 2147483648
    %v1495 = vor.u32 1.1754944e-38, %v1494
    %v1496 = vsel %vm1493, %v1495, %v1491
    %v1497 = vmul.f32 %v1401, %v1496
    %v1498 = vrcp.pop %v1434
    %v1499 = vmul.f32 %v1434, %v1498
    %v1500 = vsub.f32 1.0, %v1499
    %v1501 = vmul.f32 %v1498, %v1500
    %v1502 = vadd.f32 %v1498, %v1501
    %vm1503 = vweird.f32 %v1434
    %vm1504 = vweird.f32 %v1498
    %vm1505 = vmor %vm1503, %vm1504
    %v1506 = vsel %vm1505, %v1498, %v1502
    %v1507 = vand.u32 2147483647, %v1434
    %vm1508 = vcmp.eq.f32.partialorder %v1507, 8.507059e+37
    %v1509 = vand.u32 %v1434, 2147483648
    %v1510 = vor.u32 1.1754944e-38, %v1509
    %v1511 = vsel %vm1508, %v1510, %v1506
    %v1512 = vmul.f32 %v1402, %v1511
    %v1513 = vrcp.pop %v1435
    %v1514 = vmul.f32 %v1435, %v1513
    %v1515 = vsub.f32 1.0, %v1514
    %v1516 = vmul.f32 %v1513, %v1515
    %v1517 = vadd.f32 %v1513, %v1516
    %vm1518 = vweird.f32 %v1435
    %vm1519 = vweird.f32 %v1513
    %vm1520 = vmor %vm1518, %vm1519
    %v1521 = vsel %vm1520, %v1513, %v1517
    %v1522 = vand.u32 2147483647, %v1435
    %vm1523 = vcmp.eq.f32.partialorder %v1522, 8.507059e+37
    %v1524 = vand.u32 %v1435, 2147483648
    %v1525 = vor.u32 1.1754944e-38, %v1524
    %v1526 = vsel %vm1523, %v1525, %v1521
    %v1527 = vmul.f32 %v1403, %v1526
    %v1528 = vrcp.pop %v1436
    %v1529 = vmul.f32 %v1436, %v1528
    %v1530 = vsub.f32 1.0, %v1529
    %v1531 = vmul.f32 %v1528, %v1530
    %v1532 = vadd.f32 %v1528, %v1531
    %vm1533 = vweird.f32 %v1436
    %vm1534 = vweird.f32 %v1528
    %vm1535 = vmor %vm1533, %vm1534
    %v1536 = vsel %vm1535, %v1528, %v1532
    %v1537 = vand.u32 2147483647, %v1436
    %vm1538 = vcmp.eq.f32.partialorder %v1537, 8.507059e+37
    %v1539 = vand.u32 %v1436, 2147483648
    %v1540 = vor.u32 1.1754944e-38, %v1539
    %v1541 = vsel %vm1538, %v1540, %v1536
    %v1542 = vmul.f32 %v1404, %v1541
    %v1543 = vrcp.pop %v1437
    %v1544 = vmul.f32 %v1437, %v1543
    %v1545 = vsub.f32 1.0, %v1544
    %v1546 = vmul.f32 %v1543, %v1545
    %v1547 = vadd.f32 %v1543, %v1546
    %vm1548 = vweird.f32 %v1437
    %vm1549 = vweird.f32 %v1543
    %vm1550 = vmor %vm1548, %vm1549
    %v1551 = vsel %vm1550, %v1543, %v1547
    %v1552 = vand.u32 2147483647, %v1437
    %vm1553 = vcmp.eq.f32.partialorder %v1552, 8.507059e+37
    %v1554 = vand.u32 %v1437, 2147483648
    %v1555 = vor.u32 1.1754944e-38, %v1554
    %v1556 = vsel %vm1553, %v1555, %v1551
    %v1557 = vmul.f32 %v1405, %v1556
    %v1559 = vsel %vm479, %v1452, 0
    %v1562 = vsel %vm479, %v1467, 0
    %v1565 = vsel %vm479, %v1482, 0
    %v1568 = vsel %vm479, %v1497, 0
    %v1571 = vsel %vm479, %v1512, 0
    %v1574 = vsel %vm479, %v1527, 0
    %v1577 = vsel %vm479, %v1542, 0
    %v1580 = vsel %vm479, %v1557, 0
    %1582 = vmatpush.msra.mxu0 0.0
    %1583 = vmatpush.msra.mxu0 0.0
    %1584 = vmatpush.msra.mxu0 0.0
    %1585 = vmatpush.msra.mxu0 0.0
    %1586 = vmatpush.msra.mxu0 0.0
    %1587 = vmatpush.msra.mxu0 0.0
    %1588 = vmatpush.msra.mxu0 0.0
    %1589 = vmatpush.msra.mxu0 0.0
    %1590 = vmatpush.msra.mxu0 %v318
    %1591 = vmatpush.msra.mxu0 %v315
    %1592 = vmatpush.msra.mxu0 %v312
    %1593 = vmatpush.msra.mxu0 %v309
    %1594 = vmatpush.msra.mxu0 %v306
    %1595 = vmatpush.msra.mxu0 %v303
    %1596 = vmatpush.msra.mxu0 %v300
    %1597 = vmatpush.msra.mxu0 %v297
    %1598 = vmatmul.f32.gmra.mxu0 %v1559
    %v1599 = vpop.f32.mrf.mxu0
    %v1600 = vadd.f32 0.0, %v1599
    %1601 = vmatmul.f32.gmra.mxu0 %v1562
    %v1602 = vpop.f32.mrf.mxu0
    %v1603 = vadd.f32 0.0, %v1602
    %1604 = vmatmul.f32.gmra.mxu0 %v1565
    %v1605 = vpop.f32.mrf.mxu0
    %v1606 = vadd.f32 0.0, %v1605
    %1607 = vmatmul.f32.gmra.mxu0 %v1568
    %v1608 = vpop.f32.mrf.mxu0
    %v1609 = vadd.f32 0.0, %v1608
    %1610 = vmatmul.f32.gmra.mxu0 %v1571
    %v1611 = vpop.f32.mrf.mxu0
    %v1612 = vadd.f32 0.0, %v1611
    %1613 = vmatmul.f32.gmra.mxu0 %v1574
    %v1614 = vpop.f32.mrf.mxu0
    %v1615 = vadd.f32 0.0, %v1614
    %1616 = vmatmul.f32.gmra.mxu0 %v1577
    %v1617 = vpop.f32.mrf.mxu0
    %v1618 = vadd.f32 0.0, %v1617
    %1619 = vmatmul.f32.gmra.mxu0 %v1580
    %v1620 = vpop.f32.mrf.mxu0
    %v1621 = vadd.f32 0.0, %v1620
    %1622 = vdwg.mxu0
    %v1623 = vadd.f32 %v1600, %v1606
    %v1624 = vadd.f32 %v1603, %v1609
    %v1625 = vadd.f32 %v1623, %v1612
    %v1626 = vadd.f32 %v1624, %v1615
    %v1627 = vadd.f32 %v1625, %v1618
    %v1628 = vadd.f32 %v1626, %v1621
    %1629 = vrot.lane.b32.xlu0 %v353, 64
    %v1630 = vpop.permute.xlu0 %1629
    %1631 = vrot.lane.b32.xlu0 %v356, 64
    %v1632 = vpop.permute.xlu0 %1631
    %v1635 = vadd.f32 %v1627, %v1630
    %v1636 = vadd.f32 %v1628, %v1632
    %v1637 = vld [vmem:[#allocation8] sm:$0xff]
    %v1638 = vld [vmem:[#allocation8 + $0x8] sm:$0xff]
    %v1639 = vld [vmem:[#allocation8 + $0x10] sm:$0xff]
    %v1640 = vld [vmem:[#allocation8 + $0x18] sm:$0xff]
    %1641 = vrot.lane.b32.xlu0 %v353, 32
    %v1642 = vpop.permute.xlu0 %1641
    %1643 = vrot.lane.b32.xlu0 %v356, 32
    %v1644 = vpop.permute.xlu0 %1643
    %v1648 = vsel %vm328, %v783, 0
    %v1651 = vsel %vm328, %v784, 0
    %v1654 = vsel %vm328, %v1218, 0
    %v1657 = vsel %vm328, %v1219, 0
    %v1660 = vsel %vm328, %v1635, 0
    %v1663 = vsel %vm328, %v1636, 0
    %1665 = vmatpush.msra.mxu0 0.0
    %1666 = vmatpush.msra.mxu0 0.0
    %1667 = vmatpush.msra.mxu0 0.0
    %1668 = vmatpush.msra.mxu0 0.0
    %1669 = vmatpush.msra.mxu0 0.0
    %1670 = vmatpush.msra.mxu0 0.0
    %1671 = vmatpush.msra.mxu0 0.0
    %1672 = vmatpush.msra.mxu0 0.0
    %1673 = vmatpush.msra.mxu0 0.0
    %1674 = vmatpush.msra.mxu0 0.0
    %1675 = vmatpush.msra.mxu0 0.0
    %1676 = vmatpush.msra.mxu0 0.0
    %1677 = vmatpush.msra.mxu0 %v1640
    %1678 = vmatpush.msra.mxu0 %v1639
    %1679 = vmatpush.msra.mxu0 %v1638
    %1680 = vmatpush.msra.mxu0 %v1637
    %1681 = vmatmul.f32.gmra.mxu0 %v1648
    %v1682 = vpop.f32.mrf.mxu0
    %v1683 = vadd.f32 %v1642, %v1682
    %1684 = vmatmul.f32.gmra.mxu0 %v1651
    %v1685 = vpop.f32.mrf.mxu0
    %v1686 = vadd.f32 %v1644, %v1685
    %1687 = vmatmul.f32.gmra.mxu0 %v1654
    %v1688 = vpop.f32.mrf.mxu0
    %v1689 = vadd.f32 %v1642, %v1688
    %1690 = vmatmul.f32.gmra.mxu0 %v1657
    %v1691 = vpop.f32.mrf.mxu0
    %v1692 = vadd.f32 %v1644, %v1691
    %1693 = vmatmul.f32.gmra.mxu0 %v1660
    %v1694 = vpop.f32.mrf.mxu0
    %v1695 = vadd.f32 %v1642, %v1694
    %1696 = vmatmul.f32.gmra.mxu0 %v1663
    %v1697 = vpop.f32.mrf.mxu0
    %v1698 = vadd.f32 %v1644, %v1697
    %1699 = vdwg.mxu0
    %v1700 = vxor.u32 %v1683, 2147483648
    %v1701 = vxor.u32 %v1686, 2147483648
    %v1702 = vxor.u32 %v1689, 2147483648
    %v1703 = vxor.u32 %v1692, 2147483648
    %v1704 = vxor.u32 %v1695, 2147483648
    %v1705 = vxor.u32 %v1698, 2147483648
    %v1706 = vmul.f32 %v1700, 1.442695
    %v1707 = vpow.pop %v1706
    %v1708 = vmul.f32 %v1701, 1.442695
    %v1709 = vpow.pop %v1708
    %v1710 = vmul.f32 %v1702, 1.442695
    %v1711 = vpow.pop %v1710
    %v1712 = vmul.f32 %v1703, 1.442695
    %v1713 = vpow.pop %v1712
    %v1714 = vmul.f32 %v1704, 1.442695
    %v1715 = vpow.pop %v1714
    %v1716 = vmul.f32 %v1705, 1.442695
    %v1717 = vpow.pop %v1716
    %v1718 = vadd.f32 %v1707, 1.0
    %v1719 = vadd.f32 %v1709, 1.0
    %v1720 = vadd.f32 %v1711, 1.0
    %v1721 = vadd.f32 %v1713, 1.0
    %v1722 = vadd.f32 %v1715, 1.0
    %v1723 = vadd.f32 %v1717, 1.0
    %v1724 = vrcp.pop %v1718
    %v1725 = vmul.f32 %v1718, %v1724
    %v1726 = vsub.f32 1.0, %v1725
    %v1727 = vmul.f32 %v1724, %v1726
    %v1728 = vadd.f32 %v1724, %v1727
    %vm1729 = vweird.f32 %v1718
    %vm1730 = vweird.f32 %v1724
    %vm1731 = vmor %vm1729, %vm1730
    %v1732 = vsel %vm1731, %v1724, %v1728
    %v1733 = vand.u32 2147483647, %v1718
    %vm1734 = vcmp.eq.f32.partialorder %v1733, 8.507059e+37
    %v1735 = vand.u32 %v1718, 2147483648
    %v1736 = vor.u32 1.1754944e-38, %v1735
    %v1737 = vsel %vm1734, %v1736, %v1732
    %v1738 = vmul.f32 1.0, %v1737
    %v1739 = vrcp.pop %v1719
    %v1740 = vmul.f32 %v1719, %v1739
    %v1741 = vsub.f32 1.0, %v1740
    %v1742 = vmul.f32 %v1739, %v1741
    %v1743 = vadd.f32 %v1739, %v1742
    %vm1744 = vweird.f32 %v1719
    %vm1745 = vweird.f32 %v1739
    %vm1746 = vmor %vm1744, %vm1745
    %v1747 = vsel %vm1746, %v1739, %v1743
    %v1748 = vand.u32 2147483647, %v1719
    %vm1749 = vcmp.eq.f32.partialorder %v1748, 8.507059e+37
    %v1750 = vand.u32 %v1719, 2147483648
    %v1751 = vor.u32 1.1754944e-38, %v1750
    %v1752 = vsel %vm1749, %v1751, %v1747
    %v1753 = vmul.f32 1.0, %v1752
    %v1754 = vrcp.pop %v1720
    %v1755 = vmul.f32 %v1720, %v1754
    %v1756 = vsub.f32 1.0, %v1755
    %v1757 = vmul.f32 %v1754, %v1756
    %v1758 = vadd.f32 %v1754, %v1757
    %vm1759 = vweird.f32 %v1720
    %vm1760 = vweird.f32 %v1754
    %vm1761 = vmor %vm1759, %vm1760
    %v1762 = vsel %vm1761, %v1754, %v1758
    %v1763 = vand.u32 2147483647, %v1720
    %vm1764 = vcmp.eq.f32.partialorder %v1763, 8.507059e+37
    %v1765 = vand.u32 %v1720, 2147483648
    %v1766 = vor.u32 1.1754944e-38, %v1765
    %v1767 = vsel %vm1764, %v1766, %v1762
    %v1768 = vmul.f32 1.0, %v1767
    %v1769 = vrcp.pop %v1721
    %v1770 = vmul.f32 %v1721, %v1769
    %v1771 = vsub.f32 1.0, %v1770
    %v1772 = vmul.f32 %v1769, %v1771
    %v1773 = vadd.f32 %v1769, %v1772
    %vm1774 = vweird.f32 %v1721
    %vm1775 = vweird.f32 %v1769
    %vm1776 = vmor %vm1774, %vm1775
    %v1777 = vsel %vm1776, %v1769, %v1773
    %v1778 = vand.u32 2147483647, %v1721
    %vm1779 = vcmp.eq.f32.partialorder %v1778, 8.507059e+37
    %v1780 = vand.u32 %v1721, 2147483648
    %v1781 = vor.u32 1.1754944e-38, %v1780
    %v1782 = vsel %vm1779, %v1781, %v1777
    %v1783 = vmul.f32 1.0, %v1782
    %v1784 = vrcp.pop %v1722
    %v1785 = vmul.f32 %v1722, %v1784
    %v1786 = vsub.f32 1.0, %v1785
    %v1787 = vmul.f32 %v1784, %v1786
    %v1788 = vadd.f32 %v1784, %v1787
    %vm1789 = vweird.f32 %v1722
    %vm1790 = vweird.f32 %v1784
    %vm1791 = vmor %vm1789, %vm1790
    %v1792 = vsel %vm1791, %v1784, %v1788
    %v1793 = vand.u32 2147483647, %v1722
    %vm1794 = vcmp.eq.f32.partialorder %v1793, 8.507059e+37
    %v1795 = vand.u32 %v1722, 2147483648
    %v1796 = vor.u32 1.1754944e-38, %v1795
    %v1797 = vsel %vm1794, %v1796, %v1792
    %v1798 = vmul.f32 1.0, %v1797
    %v1799 = vrcp.pop %v1723
    %v1800 = vmul.f32 %v1723, %v1799
    %v1801 = vsub.f32 1.0, %v1800
    %v1802 = vmul.f32 %v1799, %v1801
    %v1803 = vadd.f32 %v1799, %v1802
    %vm1804 = vweird.f32 %v1723
    %vm1805 = vweird.f32 %v1799
    %vm1806 = vmor %vm1804, %vm1805
    %v1807 = vsel %vm1806, %v1799, %v1803
    %v1808 = vand.u32 2147483647, %v1723
    %vm1809 = vcmp.eq.f32.partialorder %v1808, 8.507059e+37
    %v1810 = vand.u32 %v1723, 2147483648
    %v1811 = vor.u32 1.1754944e-38, %v1810
    %v1812 = vsel %vm1809, %v1811, %v1807
    %v1813 = vmul.f32 1.0, %v1812
    %v1814 = vtanh.pop %v783
    %v1815 = vtanh.pop %v784
    %v1816 = vtanh.pop %v1218
    %v1817 = vtanh.pop %v1219
    %v1818 = vtanh.pop %v1635
    %v1819 = vtanh.pop %v1636
    %v1820 = vmul.f32 %v1814, %v1738
    %v1821 = vmul.f32 %v1815, %v1753
    %v1822 = vmul.f32 %v1816, %v1768
    %v1823 = vmul.f32 %v1817, %v1783
    %v1824 = vmul.f32 %v1818, %v1798
    %v1825 = vmul.f32 %v1819, %v1813
    %v1826 = vsub.f32 1.0, %v1738
    %v1827 = vsub.f32 1.0, %v1753
    %v1828 = vsub.f32 1.0, %v1768
    %v1829 = vsub.f32 1.0, %v1783
    %v1830 = vsub.f32 1.0, %v1798
    %v1831 = vsub.f32 1.0, %v1813
    %v1832 = vmul.f32 %v115, %v1826
    %v1833 = vmul.f32 %v116, %v1827
    %v1834 = vmul.f32 %v115, %v1828
    %v1835 = vmul.f32 %v116, %v1829
    %v1836 = vmul.f32 %v115, %v1830
    %v1837 = vmul.f32 %v116, %v1831
    %v1838 = vadd.f32 %v1820, %v1832
    %v1839 = vadd.f32 %v1821, %v1833
    %v1840 = vadd.f32 %v1822, %v1834
    %v1841 = vadd.f32 %v1823, %v1835
    %v1842 = vadd.f32 %v1824, %v1836
    %v1843 = vadd.f32 %v1825, %v1837
    %v1844 = vld [vmem:[#allocation10] sm:$0xff]
    %v1845 = vld [vmem:[#allocation10 + $0x8] sm:$0xff]
    %v1846 = vld [vmem:[#allocation10 + $0x10] sm:$0xff]
    %v1847 = vld [vmem:[#allocation10 + $0x18] sm:$0xff]
    %v1848 = vld [vmem:[#allocation10 + $0x20] sm:$0xff]
    %v1849 = vld [vmem:[#allocation10 + $0x28] sm:$0xff]
    %v1850 = vld [vmem:[#allocation10 + $0x30] sm:$0xff]
    %v1851 = vld [vmem:[#allocation10 + $0x38] sm:$0xff]
    %v1852 = vld [vmem:[%s9] sm:$0x3]
    %v1854 = vperm.slane %v1852, 0
    %v1855 = vperm.slane %v1852, 1
    %v1859 = vsel %vm328, %v1838, 0
    %v1862 = vsel %vm328, %v1839, 0
    %v1865 = vsel %vm328, %v1840, 0
    %v1868 = vsel %vm328, %v1841, 0
    %v1871 = vsel %vm328, %v1842, 0
    %v1874 = vsel %vm328, %v1843, 0
    %1876 = vmatpush.msra.mxu0 0.0
    %1877 = vmatpush.msra.mxu0 0.0
    %1878 = vmatpush.msra.mxu0 0.0
    %1879 = vmatpush.msra.mxu0 0.0
    %1880 = vmatpush.msra.mxu0 0.0
    %1881 = vmatpush.msra.mxu0 0.0
    %1882 = vmatpush.msra.mxu0 0.0
    %1883 = vmatpush.msra.mxu0 0.0
    %1884 = vmatpush.msra.mxu0 0.0
    %1885 = vmatpush.msra.mxu0 0.0
    %1886 = vmatpush.msra.mxu0 0.0
    %1887 = vmatpush.msra.mxu0 0.0
    %1888 = vmatpush.msra.mxu0 %v1850
    %1889 = vmatpush.msra.mxu0 %v1848
    %1890 = vmatpush.msra.mxu0 %v1846
    %1891 = vmatpush.msra.mxu0 %v1844
    %1892 = vmatmul.f32.gmra.mxu0 %v1859
    %v1893 = vpop.f32.mrf.mxu0
    %v1894 = vadd.f32 %v1854, %v1893
    %1895 = vmatmul.f32.gmra.mxu0 %v1862
    %v1896 = vpop.f32.mrf.mxu0
    %v1897 = vadd.f32 %v1854, %v1896
    %1898 = vmatmul.f32.gmra.mxu0 %v1865
    %v1899 = vpop.f32.mrf.mxu0
    %v1900 = vadd.f32 %v1854, %v1899
    %1901 = vmatmul.f32.gmra.mxu0 %v1868
    %v1902 = vpop.f32.mrf.mxu0
    %v1903 = vadd.f32 %v1854, %v1902
    %1904 = vmatmul.f32.gmra.mxu0 %v1871
    %v1905 = vpop.f32.mrf.mxu0
    %v1906 = vadd.f32 %v1854, %v1905
    %1907 = vmatmul.f32.gmra.mxu0 %v1874
    %v1908 = vpop.f32.mrf.mxu0
    %v1909 = vadd.f32 %v1854, %v1908
    %1910 = vdwg.mxu0
    %1911 = vmatpush.msra.mxu0 0.0
    %1912 = vmatpush.msra.mxu0 0.0
    %1913 = vmatpush.msra.mxu0 0.0
    %1914 = vmatpush.msra.mxu0 0.0
    %1915 = vmatpush.msra.mxu0 0.0
    %1916 = vmatpush.msra.mxu0 0.0
    %1917 = vmatpush.msra.mxu0 0.0
    %1918 = vmatpush.msra.mxu0 0.0
    %1919 = vmatpush.msra.mxu0 0.0
    %1920 = vmatpush.msra.mxu0 0.0
    %1921 = vmatpush.msra.mxu0 0.0
    %1922 = vmatpush.msra.mxu0 0.0
    %1923 = vmatpush.msra.mxu0 %v1851
    %1924 = vmatpush.msra.mxu0 %v1849
    %1925 = vmatpush.msra.mxu0 %v1847
    %1926 = vmatpush.msra.mxu0 %v1845
    %1927 = vmatmul.f32.gmra.mxu0 %v1859
    %v1928 = vpop.f32.mrf.mxu0
    %v1929 = vadd.f32 %v1855, %v1928
    %1930 = vmatmul.f32.gmra.mxu0 %v1862
    %v1931 = vpop.f32.mrf.mxu0
    %v1932 = vadd.f32 %v1855, %v1931
    %1933 = vmatmul.f32.gmra.mxu0 %v1865
    %v1934 = vpop.f32.mrf.mxu0
    %v1935 = vadd.f32 %v1855, %v1934
    %1936 = vmatmul.f32.gmra.mxu0 %v1868
    %v1937 = vpop.f32.mrf.mxu0
    %v1938 = vadd.f32 %v1855, %v1937
    %1939 = vmatmul.f32.gmra.mxu0 %v1871
    %v1940 = vpop.f32.mrf.mxu0
    %v1941 = vadd.f32 %v1855, %v1940
    %1942 = vmatmul.f32.gmra.mxu0 %v1874
    %v1943 = vpop.f32.mrf.mxu0
    %v1944 = vadd.f32 %v1855, %v1943
    %1945 = vdwg.mxu0
    %v1946 = vtanh.pop %v1894
    %v1947 = vtanh.pop %v1929
    %v1948 = vtanh.pop %v1897
    %v1949 = vtanh.pop %v1932
    %v1950 = vtanh.pop %v1900
    %v1951 = vtanh.pop %v1935
    %v1952 = vtanh.pop %v1903
    %v1953 = vtanh.pop %v1938
    %v1954 = vtanh.pop %v1906
    %v1955 = vtanh.pop %v1941
    %v1956 = vtanh.pop %v1909
    %v1957 = vtanh.pop %v1944
    %v1958 = vld [vmem:[%s10] sm:$0xff]
    %v1959 = vld [vmem:[%s10 + $0x8] sm:$0xff]
    %v1960 = vld [vmem:[%s10 + $0x10] sm:$0xff]
    %v1961 = vld [vmem:[%s10 + $0x18] sm:$0xff]
    %v1962 = vld [vmem:[%s10 + $0x20] sm:$0xff]
    %v1963 = vld [vmem:[%s10 + $0x28] sm:$0xff]
    %v1964 = vld [vmem:[%s10 + $0x30] sm:$0xff]
    %v1965 = vld [vmem:[%s10 + $0x38] sm:$0xff]
    %v1966 = vld [vmem:[%s10 + $0x40] sm:$0xff]
    %v1967 = vld [vmem:[%s10 + $0x48] sm:$0xff]
    %v1968 = vld [vmem:[%s10 + $0x50] sm:$0xff]
    %v1969 = vld [vmem:[%s10 + $0x58] sm:$0xff]
    %v1970 = vld [vmem:[%s10 + $0x60] sm:$0xff]
    %v1971 = vld [vmem:[%s10 + $0x68] sm:$0xff]
    %v1972 = vld [vmem:[%s10 + $0x70] sm:$0xff]
    %v1973 = vld [vmem:[%s10 + $0x78] sm:$0xff]
    %v1974 = vld [vmem:[%s10 + $0x80] sm:$0xff]
    %v1975 = vld [vmem:[%s10 + $0x88] sm:$0xff]
    %v1976 = vld [vmem:[%s10 + $0x90] sm:$0xff]
    %v1977 = vld [vmem:[%s10 + $0x98] sm:$0xff]
    %v1978 = vld [vmem:[%s10 + $0xa0] sm:$0xff]
    %v1979 = vld [vmem:[%s10 + $0xa8] sm:$0xff]
    %v1980 = vld [vmem:[%s10 + $0xb0] sm:$0xff]
    %v1981 = vld [vmem:[%s10 + $0xb8] sm:$0xff]
    %v1982 = vld [vmem:[%s10 + $0xc0] sm:$0xff]
    %v1983 = vld [vmem:[%s10 + $0xc8] sm:$0xff]
    %v1984 = vld [vmem:[%s10 + $0xd0] sm:$0xff]
    %v1985 = vld [vmem:[%s10 + $0xd8] sm:$0xff]
    %v1986 = vld [vmem:[%s10 + $0xe0] sm:$0xff]
    %v1987 = vld [vmem:[%s10 + $0xe8] sm:$0xff]
    %v1988 = vld [vmem:[%s10 + $0xf0] sm:$0xff]
    %v1989 = vld [vmem:[%s10 + $0xf8] sm:$0xff]
    %1990 = vmatpush.msra.mxu0 %v1973
    %1991 = vmatpush.msra.mxu0 %v1972
    %1992 = vmatpush.msra.mxu0 %v1971
    %1993 = vmatpush.msra.mxu0 %v1970
    %1994 = vmatpush.msra.mxu0 %v1969
    %1995 = vmatpush.msra.mxu0 %v1968
    %1996 = vmatpush.msra.mxu0 %v1967
    %1997 = vmatpush.msra.mxu0 %v1966
    %1998 = vmatpush.msra.mxu0 %v1965
    %1999 = vmatpush.msra.mxu0 %v1964
    %2000 = vmatpush.msra.mxu0 %v1963
    %2001 = vmatpush.msra.mxu0 %v1962
    %2002 = vmatpush.msra.mxu0 %v1961
    %2003 = vmatpush.msra.mxu0 %v1960
    %2004 = vmatpush.msra.mxu0 %v1959
    %2005 = vmatpush.msra.mxu0 %v1958
    %2006 = vmatmul.f32.gmra.mxu0 %v1946
    %v2007 = vpop.f32.mrf.mxu0
    %v2008 = vadd.f32 0.0, %v2007
    %2009 = vmatmul.f32.gmra.mxu0 %v1948
    %v2010 = vpop.f32.mrf.mxu0
    %v2011 = vadd.f32 0.0, %v2010
    %2012 = vmatmul.f32.gmra.mxu0 %v1950
    %v2013 = vpop.f32.mrf.mxu0
    %v2014 = vadd.f32 0.0, %v2013
    %2015 = vmatmul.f32.gmra.mxu0 %v1952
    %v2016 = vpop.f32.mrf.mxu0
    %v2017 = vadd.f32 0.0, %v2016
    %2018 = vmatmul.f32.gmra.mxu0 %v1954
    %v2019 = vpop.f32.mrf.mxu0
    %v2020 = vadd.f32 0.0, %v2019
    %2021 = vmatmul.f32.gmra.mxu0 %v1956
    %v2022 = vpop.f32.mrf.mxu0
    %v2023 = vadd.f32 0.0, %v2022
    %2024 = vdwg.mxu0
    %2025 = vmatpush.msra.mxu0 %v1989
    %2026 = vmatpush.msra.mxu0 %v1988
    %2027 = vmatpush.msra.mxu0 %v1987
    %2028 = vmatpush.msra.mxu0 %v1986
    %2029 = vmatpush.msra.mxu0 %v1985
    %2030 = vmatpush.msra.mxu0 %v1984
    %2031 = vmatpush.msra.mxu0 %v1983
    %2032 = vmatpush.msra.mxu0 %v1982
    %2033 = vmatpush.msra.mxu0 %v1981
    %2034 = vmatpush.msra.mxu0 %v1980
    %2035 = vmatpush.msra.mxu0 %v1979
    %2036 = vmatpush.msra.mxu0 %v1978
    %2037 = vmatpush.msra.mxu0 %v1977
    %2038 = vmatpush.msra.mxu0 %v1976
    %2039 = vmatpush.msra.mxu0 %v1975
    %2040 = vmatpush.msra.mxu0 %v1974
    %2041 = vmatmul.f32.gmra.mxu0 %v1947
    %v2042 = vpop.f32.mrf.mxu0
    %v2043 = vadd.f32 %v2008, %v2042
    %2044 = vmatmul.f32.gmra.mxu0 %v1949
    %v2045 = vpop.f32.mrf.mxu0
    %v2046 = vadd.f32 %v2011, %v2045
    %2047 = vmatmul.f32.gmra.mxu0 %v1951
    %v2048 = vpop.f32.mrf.mxu0
    %v2049 = vadd.f32 %v2014, %v2048
    %2050 = vmatmul.f32.gmra.mxu0 %v1953
    %v2051 = vpop.f32.mrf.mxu0
    %v2052 = vadd.f32 %v2017, %v2051
    %2053 = vmatmul.f32.gmra.mxu0 %v1955
    %v2054 = vpop.f32.mrf.mxu0
    %v2055 = vadd.f32 %v2020, %v2054
    %2056 = vmatmul.f32.gmra.mxu0 %v1957
    %v2057 = vpop.f32.mrf.mxu0
    %v2058 = vadd.f32 %v2023, %v2057
    %2059 = vdwg.mxu0
    %vm2060 = vcmask 15360
    %v2061 = vsel %vm2060, %v2043, 0.0
    %v2062 = vsel %vm2060, %v2046, 0.0
    %v2063 = vadd.f32 %v2061, %v2062
    %v2064 = vrot.slane %v2063, 4
    %v2065 = vadd.f32 %v2063, %v2064
    %v2066 = vrot.slane %v2065, 2
    %v2067 = vadd.f32 %v2065, %v2066
    %v2068 = vrot.slane %v2067, 1
    %v2069 = vadd.f32 %v2067, %v2068
    %v2070 = vmul.f32 %v2069, 0.0625
    %v2071 = vsel %vm2060, %v2049, 0.0
    %v2072 = vsel %vm2060, %v2052, 0.0
    %v2073 = vadd.f32 %v2071, %v2072
    %v2074 = vrot.slane %v2073, 4
    %v2075 = vadd.f32 %v2073, %v2074
    %v2076 = vrot.slane %v2075, 2
    %v2077 = vadd.f32 %v2075, %v2076
    %v2078 = vrot.slane %v2077, 1
    %v2079 = vadd.f32 %v2077, %v2078
    %v2080 = vmul.f32 %v2079, 0.0625
    %v2081 = vsel %vm2060, %v2055, 0.0
    %v2082 = vsel %vm2060, %v2058, 0.0
    %v2083 = vadd.f32 %v2081, %v2082
    %v2084 = vrot.slane %v2083, 4
    %v2085 = vadd.f32 %v2083, %v2084
    %v2086 = vrot.slane %v2085, 2
    %v2087 = vadd.f32 %v2085, %v2086
    %v2088 = vrot.slane %v2087, 1
    %v2089 = vadd.f32 %v2087, %v2088
    %v2090 = vmul.f32 %v2089, 0.0625
    %v2091 = vmax.f32 %v2070, %v2080
    %v2092 = vmax.f32 %v2091, %v2090
    %v2093 = vsub.f32 %v2070, %v2092
    %v2094 = vmul.f32 %v2093, 1.442695
    %v2095 = vpow.pop %v2094
    %v2096 = vsub.f32 %v2080, %v2092
    %v2097 = vmul.f32 %v2096, 1.442695
    %v2098 = vpow.pop %v2097
    %v2099 = vsub.f32 %v2090, %v2092
    %v2100 = vmul.f32 %v2099, 1.442695
    %v2101 = vpow.pop %v2100
    %v2102 = vadd.f32 %v2095, %v2098
    %v2103 = vadd.f32 %v2102, %v2101
    %v2104 = vrcp.pop %v2103
    %v2105 = vmul.f32 %v2103, %v2104
    %v2106 = vsub.f32 1.0, %v2105
    %v2107 = vmul.f32 %v2104, %v2106
    %v2108 = vadd.f32 %v2104, %v2107
    %vm2109 = vweird.f32 %v2103
    %vm2110 = vweird.f32 %v2104
    %vm2111 = vmor %vm2109, %vm2110
    %v2112 = vsel %vm2111, %v2104, %v2108
    %v2113 = vand.u32 2147483647, %v2103
    %vm2114 = vcmp.eq.f32.partialorder %v2113, 8.507059e+37
    %v2115 = vand.u32 %v2103, 2147483648
    %v2116 = vor.u32 1.1754944e-38, %v2115
    %v2117 = vsel %vm2114, %v2116, %v2112
    %v2118 = vmul.f32 %v2095, %v2117
    %v2119 = vsel %vm2060, %v2118, 0.0
    %2120 = vadd.xlane.f32.xlu0 %v2119
    %v2121 = vpop.xlane.xlu0 %2120
    %v2122 = vmul.f32 %v2121, 0.5
    %v2123 = vmul.f32 %v2122, %v1838
    %v2124 = vmul.f32 %v2122, %v1839
    %v2125 = vadd.f32 %v2123, 0.0
    %v2126 = vadd.f32 %v2124, 0.0
    %v2127 = vmul.f32 %v2098, %v2117
    %v2128 = vsel %vm2060, %v2127, 0.0
    %2129 = vadd.xlane.f32.xlu0 %v2128
    %v2130 = vpop.xlane.xlu0 %2129
    %v2131 = vmul.f32 %v2130, 0.5
    %v2132 = vmul.f32 %v2131, %v1840
    %v2133 = vmul.f32 %v2131, %v1841
    %v2134 = vadd.f32 %v2125, %v2132
    %v2135 = vadd.f32 %v2126, %v2133
    %v2136 = vmul.f32 %v2101, %v2117
    %v2137 = vsel %vm2060, %v2136, 0.0
    %2138 = vadd.xlane.f32.xlu0 %v2137
    %v2139 = vpop.xlane.xlu0 %2138
    %v2140 = vmul.f32 %v2139, 0.5
    %v2141 = vmul.f32 %v2140, %v1842
    %v2142 = vmul.f32 %v2140, %v1843
    %v2143 = vadd.f32 %v2134, %v2141
    %v2144 = vadd.f32 %v2135, %v2142
    %2145 = vst.msk [vmem:[#allocation11] sm:$0xff] %vm328, %v2143
    %2146 = vst.msk [vmem:[#allocation11 + $0x8] sm:$0xff] %vm328, %v2144
    // Predicated region
    $region66: #{tpu_custom_call.1} parent=1 // pred_check
      _
    $region67: #{tpu_custom_call.1} parent=1 // pred_check_branch
      %2148 = sbr.rel (0) target = $region69
    $region68: #{tpu_custom_call.1} parent=1 // pred_region
      %2150 = vsyncadd [#allocation4], 0
      %s2151 = sshll.u32 [#allocation11], 4
      %s2152 = int_to_ptr.vmem [resolvable:$true] %s2151
      %s2153 = sshll.u32 %s11, 4
      %s2154 = int_to_ptr.hbm [resolvable:$true] %s2153
      %2159 = dma.vmem_to_hbm [thread:$0]  %s2152, 256, %s2154, [#allocation4], 128, 128, 8
    $region69: #{tpu_custom_call.1} parent=1 // pred_fallthru
      _
    // Predicated region
    $region70: #{tpu_custom_call.1} parent=1 // pred_check
      _
    $region71: #{tpu_custom_call.1} parent=1 // pred_check_branch
      %2161 = sbr.rel (0) target = $region73
    $region72: #{tpu_custom_call.1} parent=1 // pred_region
      %2163 = dma.done [#allocation4], 256
    $region73: #{tpu_custom_call.1} parent=1 // pred_fallthru
      _
    %2164 = vsyncpa [#allocation3], 1
    %2165 = vsyncpa [#allocation6], 1
    %2166 = vsyncpa [#allocation9], 1
    %2167 = vsyncpa [#allocation4], 1

</llo_original>
